<compile_context>
chip_gen: v7x
topology: tpu7x:2x2x1
jax: 0.10.0
libtpu: 0.0.40
codegen_flags: <defaults>
</compile_context>

<pallas_src>
import math

import jax
import jax.numpy as jnp
from jax import lax
from jax.experimental import pallas as pl
from jax.experimental.pallas import tpu as pltpu


# ----------------------------- fused MLP kernel ---------------------------------------
def _relpos_mlp_kernel(coords_ref, w1_ref, b1_ref, w2_ref, out_ref):
    # coords_ref: (2, P)  row 0 = signed-log rel-h coord, row 1 = rel-w coord
    # w1_ref: (inter, 2)  b1_ref: (inter, 1)  w2_ref: (num_heads, inter)
    th = coords_ref[0:1, :]                                   # (1, P)
    tw = coords_ref[1:2, :]                                   # (1, P)
    # layer 1 (K=2): two broadcast FMAs on the VPU instead of an underfilled MXU matmul
    h = w1_ref[:, 0:1] * th + w1_ref[:, 1:2] * tw + b1_ref[...]   # (inter, P)
    h = jnp.where(h > 0, h, 0.2 * h)                          # LeakyReLU(0.2)
    # layer 2: K=inter matmul on the MXU, lane-dense (num_heads, P) result
    out_ref[...] = jnp.dot(w2_ref[...], h, preferred_element_type=jnp.float32)


# ------------------------- cached coordinate table (no_grad) ---------------------------
def _rel_coords_flat(h, w, slope, dtype=jnp.float32):
    coords_h = jnp.linspace(-2.0, 2.0, h)
    coords_w = jnp.linspace(-2.0, 2.0, w)
    dh = coords_h[None, :] - coords_h[:, None]                # (h, h)
    dw = coords_w[None, :] - coords_w[:, None]                # (w, w)
    rel_h = jnp.repeat(jnp.repeat(dh, w, axis=1), w, axis=0)  # repeat_interleave -> (N, N)
    rel_w = jnp.tile(dw, (h, h))                              # torch .repeat    -> (N, N)
    rel = jnp.stack([rel_h, rel_w])                           # (2, N, N)
    table = jnp.sign(rel) * jnp.log2(jnp.abs(rel) + 1.0) / math.log2(slope + 1.0)
    N = h * w
    return table.reshape(2, N * N).astype(dtype)              # (2, N*N), row-major over (i, j)


# -------------------------------------- wrapper ----------------------------------------
def relative_pos_emb_forward(seq_len, params, *, relative_bias_slope=8.0, tile=2048):
    h, w = seq_len
    N = h * w
    total = N * N
    inter = params["w1"].shape[0]
    num_heads = params["w2"].shape[0]

    coords = _rel_coords_flat(h, w, relative_bias_slope)      # (2, total)

    # lane-dense tiling of the flattened (i, j) points
    tile = min(tile, pl.cdiv(total, 128) * 128)
    padded = pl.cdiv(total, tile) * tile
    if padded > total:
        coords = jnp.pad(coords, ((0, 0), (0, padded - total)))

    out_flat = pl.pallas_call(
        _relpos_mlp_kernel,
        out_shape=jax.ShapeDtypeStruct((num_heads, padded), jnp.float32),
        grid=(padded // tile,),
        in_specs=[
            pl.BlockSpec((2, tile), lambda i: (0, i)),            # coord tile
            pl.BlockSpec((inter, 2), lambda i: (0, 0)),           # w1 (grid-invariant)
            pl.BlockSpec((inter, 1), lambda i: (0, 0)),           # b1 (grid-invariant)
            pl.BlockSpec((num_heads, inter), lambda i: (0, 0)),   # w2 (grid-invariant)
        ],
        out_specs=pl.BlockSpec((num_heads, tile), lambda i: (0, i)),
        compiler_params=pltpu.CompilerParams(dimension_semantics=("parallel",)),
    )(coords.astype(jnp.float32),
      params["w1"].astype(jnp.float32),
      params["b1"].reshape(inter, 1).astype(jnp.float32),
      params["w2"].astype(jnp.float32))

    # (num_heads, N*N) -> (1, num_heads, N, N)   (free row-major reshape)
    return out_flat[:, :total].reshape(num_heads, N, N)[None]


# ------------------------------ pure-JAX reference -------------------------------------
def ref_forward(seq_len, params, relative_bias_slope=8.0):
    h, w = seq_len
    coords_h = jnp.linspace(-2.0, 2.0, h)
    coords_w = jnp.linspace(-2.0, 2.0, w)
    dh = coords_h[None, :] - coords_h[:, None]
    dw = coords_w[None, :] - coords_w[:, None]
    rel_h = jnp.repeat(jnp.repeat(dh, w, axis=1), w, axis=0)
    rel_w = jnp.tile(dw, (h, h))
    rel = jnp.stack([rel_h, rel_w])
    table = jnp.sign(rel) * jnp.log2(jnp.abs(rel) + 1.0) / math.log2(relative_bias_slope + 1.0)
    table = jnp.transpose(table, (1, 2, 0))                   # (N, N, 2)
    x = jnp.einsum("ijk,nk->ijn", table, params["w1"],
                   precision=lax.Precision.HIGHEST) + params["b1"]
    x = jnp.where(x > 0, x, 0.2 * x)
    y = jnp.einsum("ijk,nk->ijn", x, params["w2"],
                   precision=lax.Precision.HIGHEST)
    return jnp.transpose(y, (2, 0, 1))[None]                  # (1, num_heads, N, N)


if __name__ == "__main__":
    key = jax.random.PRNGKey(0)
    h, w = 8, 8                        # seq_len = (8, 8)  ->  N = 64, table over 64x64 pairs
    inter, num_heads = 128, 8          # relative_bias_inter, num_heads
    slope = 8.0                        # relative_bias_slope

    k1, k2, k3 = jax.random.split(key, 3)
    params = {
        "w1": 0.2 * jax.random.normal(k1, (inter, 2), jnp.float32),   # PyTorch (out, in) layout
        "b1": 0.1 * jax.random.normal(k2, (inter,), jnp.float32),
        "w2": 0.2 * jax.random.normal(k3, (num_heads, inter), jnp.float32),  # no bias (matches module)
    }

    out = jax.block_until_ready(
        relative_pos_emb_forward((h, w), params, relative_bias_slope=slope))
    ref = ref_forward((h, w), params, slope)

    N = h * w
    assert out.shape == (1, num_heads, N, N), out.shape
    assert jnp.allclose(out, ref, atol=2e-3, rtol=2e-3), float(jnp.abs(out - ref).max())
    print("KERNEL_OK")
</pallas_src>

<mosaic_0001>
module attributes {stable_mosaic.version = 11 : i64} {
  func.func @_relpos_mlp_kernel(%arg0: i32, %arg1: memref<2x2048xf32, #tpu.memory_space<vmem>>, %arg2: memref<128x2xf32, #tpu.memory_space<vmem>>, %arg3: memref<128x1xf32, #tpu.memory_space<vmem>>, %arg4: memref<8x128xf32, #tpu.memory_space<vmem>>, %arg5: memref<8x2048xf32, #tpu.memory_space<vmem>>) attributes {dimension_semantics = [#tpu.dimension_semantics<parallel>], iteration_bounds = array<i64: 2>, scalar_prefetch = 0 : i64, scratch_operands = 0 : i64, tpu.core_type = #tpu.core_type<tc>, window_params = [{transform_indices = @transform_0, window_bounds = array<i64: 2, 2048>}, {pipeline_mode = #tpu.pipeline_mode<synchronous>, transform_indices = @transform_1, window_bounds = array<i64: 128, 2>}, {pipeline_mode = #tpu.pipeline_mode<synchronous>, transform_indices = @transform_2, window_bounds = array<i64: 128, 1>}, {pipeline_mode = #tpu.pipeline_mode<synchronous>, transform_indices = @transform_3, window_bounds = array<i64: 8, 128>}, {transform_indices = @transform_4, window_bounds = array<i64: 8, 2048>}]} {
    %c0 = arith.constant 0 : index
    %c0_0 = arith.constant 0 : index
    %0 = vector.load %arg1[%c0, %c0_0] : memref<2x2048xf32, #tpu.memory_space<vmem>>, vector<1x2048xf32>
    %c1 = arith.constant 1 : index
    %c0_1 = arith.constant 0 : index
    %1 = vector.load %arg1[%c1, %c0_1] : memref<2x2048xf32, #tpu.memory_space<vmem>>, vector<1x2048xf32>
    %c0_2 = arith.constant 0 : index
    %c0_3 = arith.constant 0 : index
    %2 = vector.load %arg2[%c0_2, %c0_3] : memref<128x2xf32, #tpu.memory_space<vmem>>, vector<128x1xf32>
    %3 = vector.broadcast %2 : vector<128x1xf32> to vector<128x2048xf32>
    %4 = vector.broadcast %0 : vector<1x2048xf32> to vector<128x2048xf32>
    %5 = arith.mulf %3, %4 : vector<128x2048xf32>
    %c0_4 = arith.constant 0 : index
    %c1_5 = arith.constant 1 : index
    %6 = vector.load %arg2[%c0_4, %c1_5] : memref<128x2xf32, #tpu.memory_space<vmem>>, vector<128x1xf32>
    %7 = vector.broadcast %6 : vector<128x1xf32> to vector<128x2048xf32>
    %8 = vector.broadcast %1 : vector<1x2048xf32> to vector<128x2048xf32>
    %9 = arith.mulf %7, %8 : vector<128x2048xf32>
    %10 = arith.addf %5, %9 : vector<128x2048xf32>
    %c0_6 = arith.constant 0 : index
    %c0_7 = arith.constant 0 : index
    %11 = vector.load %arg3[%c0_6, %c0_7] : memref<128x1xf32, #tpu.memory_space<vmem>>, vector<128x1xf32>
    %12 = vector.broadcast %11 : vector<128x1xf32> to vector<128x2048xf32>
    %13 = arith.addf %10, %12 : vector<128x2048xf32>
    %cst = arith.constant 0.000000e+00 : f32
    %14 = vector.broadcast %cst : f32 to vector<128x2048xf32>
    %15 = arith.cmpf ogt, %13, %14 : vector<128x2048xf32>
    %cst_8 = arith.constant 2.000000e-01 : f32
    %16 = vector.broadcast %cst_8 : f32 to vector<128x2048xf32>
    %17 = arith.mulf %16, %13 : vector<128x2048xf32>
    %18 = arith.select %15, %13, %17 : vector<128x2048xi1>, vector<128x2048xf32>
    %c0_9 = arith.constant 0 : index
    %c0_10 = arith.constant 0 : index
    %19 = vector.load %arg4[%c0_9, %c0_10] : memref<8x128xf32, #tpu.memory_space<vmem>>, vector<8x128xf32>
    %cst_11 = arith.constant dense<0.000000e+00> : vector<8x2048xf32>
    %20 = tpu.matmul %19, %18, %cst_11 {dimension_numbers = #tpu.dot_dimension_numbers<[1], [0], [0], [1], [0, 0, 1, 1], [], []>} : vector<8x128xf32>, vector<128x2048xf32>, vector<8x2048xf32> -> vector<8x2048xf32>
    %c0_12 = arith.constant 0 : index
    %c0_13 = arith.constant 0 : index
    %21 = vector.load %arg5[%c0_12, %c0_13] : memref<8x2048xf32, #tpu.memory_space<vmem>>, vector<8x2048xf32>
    tpu.vector_store %arg5[%c0_12, %c0_13], %20 {strides = array<i32>} : memref<8x2048xf32, #tpu.memory_space<vmem>>, vector<8x2048xf32>,
    return
  }
  func.func @transform_0(%arg0: i32) -> (i32, i32) {
    %c0_i32 = arith.constant 0 : i32
    %c0_i32_0 = arith.constant 0 : i32
    return %c0_i32, %arg0 : i32, i32
  }
  func.func @transform_1(%arg0: i32) -> (i32, i32) {
    %c0_i32 = arith.constant 0 : i32
    %c0_i32_0 = arith.constant 0 : i32
    %c0_i32_1 = arith.constant 0 : i32
    return %c0_i32, %c0_i32_0 : i32, i32
  }
  func.func @transform_2(%arg0: i32) -> (i32, i32) {
    %c0_i32 = arith.constant 0 : i32
    %c0_i32_0 = arith.constant 0 : i32
    %c0_i32_1 = arith.constant 0 : i32
    return %c0_i32, %c0_i32_0 : i32, i32
  }
  func.func @transform_3(%arg0: i32) -> (i32, i32) {
    %c0_i32 = arith.constant 0 : i32
    %c0_i32_0 = arith.constant 0 : i32
    %c0_i32_1 = arith.constant 0 : i32
    return %c0_i32, %c0_i32_0 : i32, i32
  }
  func.func @transform_4(%arg0: i32) -> (i32, i32) {
    %c0_i32 = arith.constant 0 : i32
    %c0_i32_0 = arith.constant 0 : i32
    return %c0_i32, %arg0 : i32, i32
  }
}

</mosaic_0001>

<llo_original>
// kernel: tpu_custom_call.1
$region0: #{tpu_custom_call.1}
  #allocation0 [shape = 'u32[]', space=smem, size = 0x4, offset = 0x4, fixed_abs, tag = 'smem constant byte address 0x4 - core index']
  #allocation1 [shape = 'u32[144,128]{1,0:T(1,128)}', space=vmem, size = 0x12000, scoped, tag = 'internal scratch']
  %s0 = inlined_call_operand.vmem [shape: f32[2,4096], index: 0, kind: input, shape index: {}]
  %s1 = inlined_call_operand.vmem [shape: f32[128,2], index: 1, kind: input, shape index: {}]
  %s2 = inlined_call_operand.vmem [shape: f32[128,1], index: 2, kind: input, shape index: {}]
  %s3 = inlined_call_operand.vmem [shape: f32[8,128], index: 3, kind: input, shape index: {}]
  %s4 = inlined_call_operand.hbm [shape: f32[8,4096], index: 4, kind: output, shape index: {}]
  %s5 = sld [smem:[#allocation0]]
  $region49: #{tpu_custom_call.1} parent=0
    _
  %s7 = ssub.s32 1, %s5
  %s8 = scalar_select 0, %s7, %s5
  $region1: #{tpu_custom_call.1} parent=0
    #allocation2 [shape = 'u8[131072]{0}', space=vmem, size = 0x20000, scoped, tag = 'output window, operand 0']
    #allocation3 [shape = 's32[2]{0}', space=sflag, size = 0x8, scoped, tag = 'scoped memory for tpu_custom_call.1']
    %9 = vsyncpa [#allocation3], 0
    %s10 = scalar_lea.sflag [#allocation3], 1
    %11 = vsyncpa %s10, 0
    loop: start=0, step=1, limit=4
    $region2: #{tpu_custom_call.1} parent=1 // loop_pre_header
      _
    $region3: #{tpu_custom_call.1} parent=1 // loop_header
      %s13 = sphi 0, %s17
      %p14 = scmp.ge.s32.totalorder %s13, 4
      %s23 = sphi 0, %s25
      %s26 = sphi 0, %s23
      %s27 = sphi 0, %s26
      %s43 = sphi 0, %s27
      %s47 = sphi 0, %s47
      %s49 = sphi 0, %s47
      %s50 = sphi 0, %s49
      %s64 = sphi 0, %s50
      %s68 = sphi 0, %s68
      %s70 = sphi 0, %s68
      %s71 = sphi 0, %s70
      %s85 = sphi 0, %s71
      %s89 = sphi 0, %s89
      %s91 = sphi 0, %s89
      %s92 = sphi 0, %s91
      %s106 = sphi 0, %s92
      %s112 = sphi 0, %s114
      %s115 = sphi 0, %s112
      %s116 = sphi 0, %s115
      %s132 = sphi 0, %s116
    $region4: #{tpu_custom_call.1} parent=1 // loop_header_branch
      %16 = sbr.rel (%p14) target = $region8
    $region5: #{tpu_custom_call.1} parent=1 // loop_body
      %s18 = ssub.s32 %s13, 1
      %s19 = ssub.s32 %s13, 2
      %s20 = sadd.s32 %s13, 1
      %s21 = ssub.s32 %s13, %s20
      %p22 = scmp.eq.s32.totalorder %s21, 0
      %s24 = sadd.s32 %s23, 1
      %s25 = scalar_select %p22, %s23, %s24
      %p28 = pneg %p22
      %p29 = scmp.eq.s32.totalorder %s13, 1
      %p30 = por %p28, %p29
      %p31 = scmp.ne.s32.totalorder %s23, %s26
      %p32 = scmp.eq.s32.totalorder %s13, 0
      %p33 = por %p31, %p32
      %p34 = scmp.ne.s32.totalorder %s23, %s26
      %p35 = scmp.eq.s32.totalorder %s18, 1
      %p36 = por %p34, %p35
      %p37 = scmp.ne.s32.totalorder %s26, %s27
      %p38 = scmp.eq.s32.totalorder %s18, 0
      %p39 = por %p37, %p38
      %p40 = scmp.ne.s32.totalorder %s26, %s27
      %p41 = scmp.eq.s32.totalorder %s19, 1
      %p42 = por %p40, %p41
      %p44 = scmp.ne.s32.totalorder %s27, %s43
      %p45 = scmp.eq.s32.totalorder %s19, 0
      %p46 = por %p44, %p45
      %s48 = sadd.s32 %s47, 1
      %p51 = scmp.eq.s32.totalorder %s13, 1
      %p52 = scmp.ne.s32.totalorder %s47, %s49
      %p53 = scmp.eq.s32.totalorder %s13, 0
      %p54 = por %p52, %p53
      %p55 = scmp.ne.s32.totalorder %s47, %s49
      %p56 = scmp.eq.s32.totalorder %s18, 1
      %p57 = por %p55, %p56
      %p58 = scmp.ne.s32.totalorder %s49, %s50
      %p59 = scmp.eq.s32.totalorder %s18, 0
      %p60 = por %p58, %p59
      %p61 = scmp.ne.s32.totalorder %s49, %s50
      %p62 = scmp.eq.s32.totalorder %s19, 1
      %p63 = por %p61, %p62
      %p65 = scmp.ne.s32.totalorder %s50, %s64
      %p66 = scmp.eq.s32.totalorder %s19, 0
      %p67 = por %p65, %p66
      %s69 = sadd.s32 %s68, 1
      %p72 = scmp.eq.s32.totalorder %s13, 1
      %p73 = scmp.ne.s32.totalorder %s68, %s70
      %p74 = scmp.eq.s32.totalorder %s13, 0
      %p75 = por %p73, %p74
      %p76 = scmp.ne.s32.totalorder %s68, %s70
      %p77 = scmp.eq.s32.totalorder %s18, 1
      %p78 = por %p76, %p77
      %p79 = scmp.ne.s32.totalorder %s70, %s71
      %p80 = scmp.eq.s32.totalorder %s18, 0
      %p81 = por %p79, %p80
      %p82 = scmp.ne.s32.totalorder %s70, %s71
      %p83 = scmp.eq.s32.totalorder %s19, 1
      %p84 = por %p82, %p83
      %p86 = scmp.ne.s32.totalorder %s71, %s85
      %p87 = scmp.eq.s32.totalorder %s19, 0
      %p88 = por %p86, %p87
      %s90 = sadd.s32 %s89, 1
      %p93 = scmp.eq.s32.totalorder %s13, 1
      %p94 = scmp.ne.s32.totalorder %s89, %s91
      %p95 = scmp.eq.s32.totalorder %s13, 0
      %p96 = por %p94, %p95
      %p97 = scmp.ne.s32.totalorder %s89, %s91
      %p98 = scmp.eq.s32.totalorder %s18, 1
      %p99 = por %p97, %p98
      %p100 = scmp.ne.s32.totalorder %s91, %s92
      %p101 = scmp.eq.s32.totalorder %s18, 0
      %p102 = por %p100, %p101
      %p103 = scmp.ne.s32.totalorder %s91, %s92
      %p104 = scmp.eq.s32.totalorder %s19, 1
      %p105 = por %p103, %p104
      %p107 = scmp.ne.s32.totalorder %s92, %s106
      %p108 = scmp.eq.s32.totalorder %s19, 0
      %p109 = por %p107, %p108
      %s110 = ssub.s32 %s13, %s20
      %p111 = scmp.eq.s32.totalorder %s110, 0
      %s113 = sadd.s32 %s112, 1
      %s114 = scalar_select %p111, %s112, %s113
      %p117 = pneg %p111
      %p118 = scmp.eq.s32.totalorder %s13, 1
      %p119 = por %p117, %p118
      %p120 = scmp.ne.s32.totalorder %s112, %s115
      %p121 = scmp.eq.s32.totalorder %s13, 0
      %p122 = por %p120, %p121
      %p123 = scmp.ne.s32.totalorder %s112, %s115
      %p124 = scmp.eq.s32.totalorder %s18, 1
      %p125 = por %p123, %p124
      %p126 = scmp.ne.s32.totalorder %s115, %s116
      %p127 = scmp.eq.s32.totalorder %s18, 0
      %p128 = por %p126, %p127
      %p129 = scmp.ne.s32.totalorder %s115, %s116
      %p130 = scmp.eq.s32.totalorder %s19, 1
      %p131 = por %p129, %p130
      %p133 = scmp.ne.s32.totalorder %s116, %s132
      %p134 = scmp.eq.s32.totalorder %s19, 0
      %p135 = por %p133, %p134
      %p136 = scmp.le.s32.totalorder 1, %s13
      %p137 = scmp.lt.s32.totalorder %s13, 3
      %p138 = pnand %p136, %p137
      %p139 = pneg %p138
      // Predicated region
      $region9: #{tpu_custom_call.1} parent=5 // pred_check
        _
      $region10: #{tpu_custom_call.1} parent=5 // pred_check_branch
        %141 = sbr.rel (%p138) target = $region12
      $region11: #{tpu_custom_call.1} parent=5 // pred_region
        %s142 = ssub.s32 %s13, 1
        // Predicated region
        $region13: #{tpu_custom_call.1} parent=11 // pred_check
          %p143 = pneg %p60
        $region14: #{tpu_custom_call.1} parent=11 // pred_check_branch
          %145 = sbr.rel (%p143) target = $region16
        $region15: #{tpu_custom_call.1} parent=11 // pred_region
          _
        $region16: #{tpu_custom_call.1} parent=11 // pred_fallthru
          _
        // Predicated region
        $region17: #{tpu_custom_call.1} parent=11 // pred_check
          %p146 = pneg %p81
        $region18: #{tpu_custom_call.1} parent=11 // pred_check_branch
          %148 = sbr.rel (%p146) target = $region20
        $region19: #{tpu_custom_call.1} parent=11 // pred_region
          _
        $region20: #{tpu_custom_call.1} parent=11 // pred_fallthru
          _
        // Predicated region
        $region21: #{tpu_custom_call.1} parent=11 // pred_check
          %p149 = pneg %p102
        $region22: #{tpu_custom_call.1} parent=11 // pred_check_branch
          %151 = sbr.rel (%p149) target = $region24
        $region23: #{tpu_custom_call.1} parent=11 // pred_region
          _
        $region24: #{tpu_custom_call.1} parent=11 // pred_fallthru
          _
      $region12: #{tpu_custom_call.1} parent=5 // pred_fallthru
        _
      %p152 = scmp.lt.s32.totalorder %s13, 2
      // Predicated region
      $region25: #{tpu_custom_call.1} parent=5 // pred_check
        %p153 = pneg %p152
      $region26: #{tpu_custom_call.1} parent=5 // pred_check_branch
        %155 = sbr.rel (%p153) target = $region28
      $region27: #{tpu_custom_call.1} parent=5 // pred_region
        // Predicated region
        $region29: #{tpu_custom_call.1} parent=27 // pred_check
          %p156 = pneg %p33
        $region30: #{tpu_custom_call.1} parent=27 // pred_check_branch
          %158 = sbr.rel (%p156) target = $region32
        $region31: #{tpu_custom_call.1} parent=27 // pred_region
          %s159 = smul.u32 16, %s13
          %p160 = scmp.lt.s32.totalorder %s159, 31
          %s161 = scalar_select %p160, %s159, 31
          %s162 = smul.addr %s161, 2
          %s163 = scalar_lea.vmem %s0, %s162
          %s164 = smul.u32 16, %s13
        $region32: #{tpu_custom_call.1} parent=27 // pred_fallthru
          _
      $region28: #{tpu_custom_call.1} parent=5 // pred_fallthru
        _
      %p165 = scmp.le.s32.totalorder 1, %s13
      %p166 = scmp.lt.s32.totalorder %s13, 3
      %p167 = pnand %p165, %p166
      %p168 = pneg %p167
      // Predicated region
      $region33: #{tpu_custom_call.1} parent=5 // pred_check
        _
      $region34: #{tpu_custom_call.1} parent=5 // pred_check_branch
        %170 = sbr.rel (%p167) target = $region36
      $region35: #{tpu_custom_call.1} parent=5 // pred_region
        %s171 = ssub.s32 %s13, 1
        %s172 = smul.u32 16, %s18
        %p173 = scmp.lt.s32.totalorder %s172, 31
        %s174 = scalar_select %p173, %s172, 31
        %s175 = smul.addr %s174, 2
        %s176 = scalar_lea.vmem %s0, %s175
        %p177 = pneg %p39
        %p178 = pneg %p36
        %p179 = pneg %p60
        %p180 = pneg %p57
        %p181 = pneg %p81
        %p182 = pneg %p78
        %p183 = pneg %p102
        %p184 = pneg %p99
        %p185 = pneg %p128
        %p186 = pneg %p125
        %s187 = sand.u32 %s115, 1
        %s188 = scalar_lea.sflag [#allocation3], %s187
        %s189 = sand.u32 %s115, 1
        %s190 = smul.addr %s189, 128
        %s191 = scalar_lea.vmem [#allocation2], %s190
        %s192 = smul.u32 16, %s18
        %p193 = scmp.lt.s32.totalorder %s192, 31
        %s194 = scalar_select %p193, %s192, 31
        %s195 = smul.addr %s194, 2
        %s196 = scalar_lea.vmem %s0, %s195
        %s197 = smul.u32 16, %s18
        %s198 = smul.u32 16, %s18
        %v199 = vld [vmem:[%s196] ss:$2 sm:$0xff]
        %s200 = scalar_lea.vmem %s196, 16
        %v201 = vld [vmem:[%s200] ss:$2 sm:$0xff]
        %s202 = scalar_lea.vmem %s196, 1
        %v203 = vld [vmem:[%s202] ss:$2 sm:$0xff]
        %s204 = scalar_lea.vmem %s196, 17
        %v205 = vld [vmem:[%s204] ss:$2 sm:$0xff]
        %v206 = vld [vmem:[%s1] sm:$0xff]
        %v207 = vld [vmem:[%s1 + $0x8] sm:$0xff]
        %v208 = vld [vmem:[%s1 + $0x10] sm:$0xff]
        %v209 = vld [vmem:[%s1 + $0x18] sm:$0xff]
        %v210 = vld [vmem:[%s1 + $0x20] sm:$0xff]
        %v211 = vld [vmem:[%s1 + $0x28] sm:$0xff]
        %v212 = vld [vmem:[%s1 + $0x30] sm:$0xff]
        %v213 = vld [vmem:[%s1 + $0x38] sm:$0xff]
        %v214 = vld [vmem:[%s1 + $0x40] sm:$0xff]
        %v215 = vld [vmem:[%s1 + $0x48] sm:$0xff]
        %v216 = vld [vmem:[%s1 + $0x50] sm:$0xff]
        %v217 = vld [vmem:[%s1 + $0x58] sm:$0xff]
        %v218 = vld [vmem:[%s1 + $0x60] sm:$0xff]
        %v219 = vld [vmem:[%s1 + $0x68] sm:$0xff]
        %v220 = vld [vmem:[%s1 + $0x70] sm:$0xff]
        %v221 = vld [vmem:[%s1 + $0x78] sm:$0xff]
        %223 = vset.pattern.permute.xlu0 0
        %224 = vperm.xlu0 %223, %v206
        %v225 = vpop.permute.xlu0 %224
        %228 = vset.pattern.permute.xlu0 0
        %229 = vperm.xlu0 %228, %v207
        %v230 = vpop.permute.xlu0 %229
        %233 = vset.pattern.permute.xlu0 0
        %234 = vperm.xlu0 %233, %v208
        %v235 = vpop.permute.xlu0 %234
        %238 = vset.pattern.permute.xlu0 0
        %239 = vperm.xlu0 %238, %v209
        %v240 = vpop.permute.xlu0 %239
        %243 = vset.pattern.permute.xlu0 0
        %244 = vperm.xlu0 %243, %v210
        %v245 = vpop.permute.xlu0 %244
        %248 = vset.pattern.permute.xlu0 0
        %249 = vperm.xlu0 %248, %v211
        %v250 = vpop.permute.xlu0 %249
        %253 = vset.pattern.permute.xlu0 0
        %254 = vperm.xlu0 %253, %v212
        %v255 = vpop.permute.xlu0 %254
        %258 = vset.pattern.permute.xlu0 0
        %259 = vperm.xlu0 %258, %v213
        %v260 = vpop.permute.xlu0 %259
        %263 = vset.pattern.permute.xlu0 0
        %264 = vperm.xlu0 %263, %v214
        %v265 = vpop.permute.xlu0 %264
        %268 = vset.pattern.permute.xlu0 0
        %269 = vperm.xlu0 %268, %v215
        %v270 = vpop.permute.xlu0 %269
        %273 = vset.pattern.permute.xlu0 0
        %274 = vperm.xlu0 %273, %v216
        %v275 = vpop.permute.xlu0 %274
        %278 = vset.pattern.permute.xlu0 0
        %279 = vperm.xlu0 %278, %v217
        %v280 = vpop.permute.xlu0 %279
        %283 = vset.pattern.permute.xlu0 0
        %284 = vperm.xlu0 %283, %v218
        %v285 = vpop.permute.xlu0 %284
        %288 = vset.pattern.permute.xlu0 0
        %289 = vperm.xlu0 %288, %v219
        %v290 = vpop.permute.xlu0 %289
        %293 = vset.pattern.permute.xlu0 0
        %294 = vperm.xlu0 %293, %v220
        %v295 = vpop.permute.xlu0 %294
        %298 = vset.pattern.permute.xlu0 0
        %299 = vperm.xlu0 %298, %v221
        %v300 = vpop.permute.xlu0 %299
        %v304 = vlaneseq
        %v305 = vshrl.u32 %v304, 7
        %v306 = vsub.s32 0, %v305
        %v307 = vrot.slane %v199, %v306
        %v308 = vlaneseq
        %v309 = vshrl.u32 %v308, 7
        %v310 = vsub.s32 1, %v309
        %v311 = vrot.slane %v199, %v310
        %v312 = vlaneseq
        %v313 = vshrl.u32 %v312, 7
        %v314 = vsub.s32 2, %v313
        %v315 = vrot.slane %v199, %v314
        %v316 = vlaneseq
        %v317 = vshrl.u32 %v316, 7
        %v318 = vsub.s32 3, %v317
        %v319 = vrot.slane %v199, %v318
        %v320 = vlaneseq
        %v321 = vshrl.u32 %v320, 7
        %v322 = vsub.s32 4, %v321
        %v323 = vrot.slane %v199, %v322
        %v324 = vlaneseq
        %v325 = vshrl.u32 %v324, 7
        %v326 = vsub.s32 5, %v325
        %v327 = vrot.slane %v199, %v326
        %v328 = vlaneseq
        %v329 = vshrl.u32 %v328, 7
        %v330 = vsub.s32 6, %v329
        %v331 = vrot.slane %v199, %v330
        %v332 = vlaneseq
        %v333 = vshrl.u32 %v332, 7
        %v334 = vsub.s32 7, %v333
        %v335 = vrot.slane %v199, %v334
        %v336 = vlaneseq
        %v337 = vshrl.u32 %v336, 7
        %v338 = vsub.s32 0, %v337
        %v339 = vrot.slane %v201, %v338
        %v340 = vlaneseq
        %v341 = vshrl.u32 %v340, 7
        %v342 = vsub.s32 1, %v341
        %v343 = vrot.slane %v201, %v342
        %v344 = vlaneseq
        %v345 = vshrl.u32 %v344, 7
        %v346 = vsub.s32 2, %v345
        %v347 = vrot.slane %v201, %v346
        %v348 = vlaneseq
        %v349 = vshrl.u32 %v348, 7
        %v350 = vsub.s32 3, %v349
        %v351 = vrot.slane %v201, %v350
        %v352 = vlaneseq
        %v353 = vshrl.u32 %v352, 7
        %v354 = vsub.s32 4, %v353
        %v355 = vrot.slane %v201, %v354
        %v356 = vlaneseq
        %v357 = vshrl.u32 %v356, 7
        %v358 = vsub.s32 5, %v357
        %v359 = vrot.slane %v201, %v358
        %v360 = vlaneseq
        %v361 = vshrl.u32 %v360, 7
        %v362 = vsub.s32 6, %v361
        %v363 = vrot.slane %v201, %v362
        %v364 = vlaneseq
        %v365 = vshrl.u32 %v364, 7
        %v366 = vsub.s32 7, %v365
        %v367 = vrot.slane %v201, %v366
        %v384 = vmul.f32 %v225, %v307
        %v385 = vmul.f32 %v225, %v311
        %v386 = vmul.f32 %v225, %v315
        %v387 = vmul.f32 %v225, %v319
        %v388 = vmul.f32 %v225, %v323
        %v389 = vmul.f32 %v225, %v327
        %v390 = vmul.f32 %v225, %v331
        %v391 = vmul.f32 %v225, %v335
        %v392 = vmul.f32 %v225, %v339
        %v393 = vmul.f32 %v225, %v343
        %v394 = vmul.f32 %v225, %v347
        %v395 = vmul.f32 %v225, %v351
        %v396 = vmul.f32 %v225, %v355
        %v397 = vmul.f32 %v225, %v359
        %v398 = vmul.f32 %v225, %v363
        %v399 = vmul.f32 %v225, %v367
        %v400 = vmul.f32 %v230, %v307
        %v401 = vmul.f32 %v230, %v311
        %v402 = vmul.f32 %v230, %v315
        %v403 = vmul.f32 %v230, %v319
        %v404 = vmul.f32 %v230, %v323
        %v405 = vmul.f32 %v230, %v327
        %v406 = vmul.f32 %v230, %v331
        %v407 = vmul.f32 %v230, %v335
        %v408 = vmul.f32 %v230, %v339
        %v409 = vmul.f32 %v230, %v343
        %v410 = vmul.f32 %v230, %v347
        %v411 = vmul.f32 %v230, %v351
        %v412 = vmul.f32 %v230, %v355
        %v413 = vmul.f32 %v230, %v359
        %v414 = vmul.f32 %v230, %v363
        %v415 = vmul.f32 %v230, %v367
        %v416 = vmul.f32 %v235, %v307
        %v417 = vmul.f32 %v235, %v311
        %v418 = vmul.f32 %v235, %v315
        %v419 = vmul.f32 %v235, %v319
        %v420 = vmul.f32 %v235, %v323
        %v421 = vmul.f32 %v235, %v327
        %v422 = vmul.f32 %v235, %v331
        %v423 = vmul.f32 %v235, %v335
        %v424 = vmul.f32 %v235, %v339
        %v425 = vmul.f32 %v235, %v343
        %v426 = vmul.f32 %v235, %v347
        %v427 = vmul.f32 %v235, %v351
        %v428 = vmul.f32 %v235, %v355
        %v429 = vmul.f32 %v235, %v359
        %v430 = vmul.f32 %v235, %v363
        %v431 = vmul.f32 %v235, %v367
        %v432 = vmul.f32 %v240, %v307
        %v433 = vmul.f32 %v240, %v311
        %v434 = vmul.f32 %v240, %v315
        %v435 = vmul.f32 %v240, %v319
        %v436 = vmul.f32 %v240, %v323
        %v437 = vmul.f32 %v240, %v327
        %v438 = vmul.f32 %v240, %v331
        %v439 = vmul.f32 %v240, %v335
        %v440 = vmul.f32 %v240, %v339
        %v441 = vmul.f32 %v240, %v343
        %v442 = vmul.f32 %v240, %v347
        %v443 = vmul.f32 %v240, %v351
        %v444 = vmul.f32 %v240, %v355
        %v445 = vmul.f32 %v240, %v359
        %v446 = vmul.f32 %v240, %v363
        %v447 = vmul.f32 %v240, %v367
        %v448 = vmul.f32 %v245, %v307
        %v449 = vmul.f32 %v245, %v311
        %v450 = vmul.f32 %v245, %v315
        %v451 = vmul.f32 %v245, %v319
        %v452 = vmul.f32 %v245, %v323
        %v453 = vmul.f32 %v245, %v327
        %v454 = vmul.f32 %v245, %v331
        %v455 = vmul.f32 %v245, %v335
        %v456 = vmul.f32 %v245, %v339
        %v457 = vmul.f32 %v245, %v343
        %v458 = vmul.f32 %v245, %v347
        %v459 = vmul.f32 %v245, %v351
        %v460 = vmul.f32 %v245, %v355
        %v461 = vmul.f32 %v245, %v359
        %v462 = vmul.f32 %v245, %v363
        %v463 = vmul.f32 %v245, %v367
        %v464 = vmul.f32 %v250, %v307
        %v465 = vmul.f32 %v250, %v311
        %v466 = vmul.f32 %v250, %v315
        %v467 = vmul.f32 %v250, %v319
        %v468 = vmul.f32 %v250, %v323
        %v469 = vmul.f32 %v250, %v327
        %v470 = vmul.f32 %v250, %v331
        %v471 = vmul.f32 %v250, %v335
        %v472 = vmul.f32 %v250, %v339
        %v473 = vmul.f32 %v250, %v343
        %v474 = vmul.f32 %v250, %v347
        %v475 = vmul.f32 %v250, %v351
        %v476 = vmul.f32 %v250, %v355
        %v477 = vmul.f32 %v250, %v359
        %v478 = vmul.f32 %v250, %v363
        %v479 = vmul.f32 %v250, %v367
        %v480 = vmul.f32 %v255, %v307
        %v481 = vmul.f32 %v255, %v311
        %v482 = vmul.f32 %v255, %v315
        %v483 = vmul.f32 %v255, %v319
        %v484 = vmul.f32 %v255, %v323
        %v485 = vmul.f32 %v255, %v327
        %v486 = vmul.f32 %v255, %v331
        %v487 = vmul.f32 %v255, %v335
        %v488 = vmul.f32 %v255, %v339
        %v489 = vmul.f32 %v255, %v343
        %v490 = vmul.f32 %v255, %v347
        %v491 = vmul.f32 %v255, %v351
        %v492 = vmul.f32 %v255, %v355
        %v493 = vmul.f32 %v255, %v359
        %v494 = vmul.f32 %v255, %v363
        %v495 = vmul.f32 %v255, %v367
        %v496 = vmul.f32 %v260, %v307
        %v497 = vmul.f32 %v260, %v311
        %v498 = vmul.f32 %v260, %v315
        %v499 = vmul.f32 %v260, %v319
        %v500 = vmul.f32 %v260, %v323
        %v501 = vmul.f32 %v260, %v327
        %v502 = vmul.f32 %v260, %v331
        %v503 = vmul.f32 %v260, %v335
        %v504 = vmul.f32 %v260, %v339
        %v505 = vmul.f32 %v260, %v343
        %v506 = vmul.f32 %v260, %v347
        %v507 = vmul.f32 %v260, %v351
        %v508 = vmul.f32 %v260, %v355
        %v509 = vmul.f32 %v260, %v359
        %v510 = vmul.f32 %v260, %v363
        %v511 = vmul.f32 %v260, %v367
        %v512 = vmul.f32 %v265, %v307
        %v513 = vmul.f32 %v265, %v311
        %v514 = vmul.f32 %v265, %v315
        %v515 = vmul.f32 %v265, %v319
        %v516 = vmul.f32 %v265, %v323
        %v517 = vmul.f32 %v265, %v327
        %v518 = vmul.f32 %v265, %v331
        %v519 = vmul.f32 %v265, %v335
        %v520 = vmul.f32 %v265, %v339
        %v521 = vmul.f32 %v265, %v343
        %v522 = vmul.f32 %v265, %v347
        %v523 = vmul.f32 %v265, %v351
        %v524 = vmul.f32 %v265, %v355
        %v525 = vmul.f32 %v265, %v359
        %v526 = vmul.f32 %v265, %v363
        %v527 = vmul.f32 %v265, %v367
        %v528 = vmul.f32 %v270, %v307
        %v529 = vmul.f32 %v270, %v311
        %v530 = vmul.f32 %v270, %v315
        %v531 = vmul.f32 %v270, %v319
        %v532 = vmul.f32 %v270, %v323
        %v533 = vmul.f32 %v270, %v327
        %v534 = vmul.f32 %v270, %v331
        %v535 = vmul.f32 %v270, %v335
        %v536 = vmul.f32 %v270, %v339
        %v537 = vmul.f32 %v270, %v343
        %v538 = vmul.f32 %v270, %v347
        %v539 = vmul.f32 %v270, %v351
        %v540 = vmul.f32 %v270, %v355
        %v541 = vmul.f32 %v270, %v359
        %v542 = vmul.f32 %v270, %v363
        %v543 = vmul.f32 %v270, %v367
        %v544 = vmul.f32 %v275, %v307
        %v545 = vmul.f32 %v275, %v311
        %v546 = vmul.f32 %v275, %v315
        %v547 = vmul.f32 %v275, %v319
        %v548 = vmul.f32 %v275, %v323
        %v549 = vmul.f32 %v275, %v327
        %v550 = vmul.f32 %v275, %v331
        %v551 = vmul.f32 %v275, %v335
        %v552 = vmul.f32 %v275, %v339
        %v553 = vmul.f32 %v275, %v343
        %v554 = vmul.f32 %v275, %v347
        %v555 = vmul.f32 %v275, %v351
        %v556 = vmul.f32 %v275, %v355
        %v557 = vmul.f32 %v275, %v359
        %v558 = vmul.f32 %v275, %v363
        %v559 = vmul.f32 %v275, %v367
        %v560 = vmul.f32 %v280, %v307
        %v561 = vmul.f32 %v280, %v311
        %v562 = vmul.f32 %v280, %v315
        %v563 = vmul.f32 %v280, %v319
        %v564 = vmul.f32 %v280, %v323
        %v565 = vmul.f32 %v280, %v327
        %v566 = vmul.f32 %v280, %v331
        %v567 = vmul.f32 %v280, %v335
        %v568 = vmul.f32 %v280, %v339
        %v569 = vmul.f32 %v280, %v343
        %v570 = vmul.f32 %v280, %v347
        %v571 = vmul.f32 %v280, %v351
        %v572 = vmul.f32 %v280, %v355
        %v573 = vmul.f32 %v280, %v359
        %v574 = vmul.f32 %v280, %v363
        %v575 = vmul.f32 %v280, %v367
        %v576 = vmul.f32 %v285, %v307
        %v577 = vmul.f32 %v285, %v311
        %v578 = vmul.f32 %v285, %v315
        %v579 = vmul.f32 %v285, %v319
        %v580 = vmul.f32 %v285, %v323
        %v581 = vmul.f32 %v285, %v327
        %v582 = vmul.f32 %v285, %v331
        %v583 = vmul.f32 %v285, %v335
        %v584 = vmul.f32 %v285, %v339
        %v585 = vmul.f32 %v285, %v343
        %v586 = vmul.f32 %v285, %v347
        %v587 = vmul.f32 %v285, %v351
        %v588 = vmul.f32 %v285, %v355
        %v589 = vmul.f32 %v285, %v359
        %v590 = vmul.f32 %v285, %v363
        %v591 = vmul.f32 %v285, %v367
        %v592 = vmul.f32 %v290, %v307
        %v593 = vmul.f32 %v290, %v311
        %v594 = vmul.f32 %v290, %v315
        %v595 = vmul.f32 %v290, %v319
        %v596 = vmul.f32 %v290, %v323
        %v597 = vmul.f32 %v290, %v327
        %v598 = vmul.f32 %v290, %v331
        %v599 = vmul.f32 %v290, %v335
        %v600 = vmul.f32 %v290, %v339
        %v601 = vmul.f32 %v290, %v343
        %v602 = vmul.f32 %v290, %v347
        %v603 = vmul.f32 %v290, %v351
        %v604 = vmul.f32 %v290, %v355
        %v605 = vmul.f32 %v290, %v359
        %v606 = vmul.f32 %v290, %v363
        %v607 = vmul.f32 %v290, %v367
        %v608 = vmul.f32 %v295, %v307
        %v609 = vmul.f32 %v295, %v311
        %v610 = vmul.f32 %v295, %v315
        %v611 = vmul.f32 %v295, %v319
        %v612 = vmul.f32 %v295, %v323
        %v613 = vmul.f32 %v295, %v327
        %v614 = vmul.f32 %v295, %v331
        %v615 = vmul.f32 %v295, %v335
        %v616 = vmul.f32 %v295, %v339
        %v617 = vmul.f32 %v295, %v343
        %v618 = vmul.f32 %v295, %v347
        %v619 = vmul.f32 %v295, %v351
        %v620 = vmul.f32 %v295, %v355
        %v621 = vmul.f32 %v295, %v359
        %v622 = vmul.f32 %v295, %v363
        %v623 = vmul.f32 %v295, %v367
        %v624 = vmul.f32 %v300, %v307
        %v625 = vmul.f32 %v300, %v311
        %v626 = vmul.f32 %v300, %v315
        %v627 = vmul.f32 %v300, %v319
        %v628 = vmul.f32 %v300, %v323
        %v629 = vmul.f32 %v300, %v327
        %v630 = vmul.f32 %v300, %v331
        %v631 = vmul.f32 %v300, %v335
        %v632 = vmul.f32 %v300, %v339
        %v633 = vmul.f32 %v300, %v343
        %v634 = vmul.f32 %v300, %v347
        %v635 = vmul.f32 %v300, %v351
        %v636 = vmul.f32 %v300, %v355
        %v637 = vmul.f32 %v300, %v359
        %v638 = vmul.f32 %v300, %v363
        %v639 = vmul.f32 %v300, %v367
        %640 = vset.pattern.permute.xlu0 1
        %641 = vperm.xlu0 %640, %v206
        %v642 = vpop.permute.xlu0 %641
        %644 = vset.pattern.permute.xlu0 1
        %645 = vperm.xlu0 %644, %v207
        %v646 = vpop.permute.xlu0 %645
        %648 = vset.pattern.permute.xlu0 1
        %649 = vperm.xlu0 %648, %v208
        %v650 = vpop.permute.xlu0 %649
        %652 = vset.pattern.permute.xlu0 1
        %653 = vperm.xlu0 %652, %v209
        %v654 = vpop.permute.xlu0 %653
        %656 = vset.pattern.permute.xlu0 1
        %657 = vperm.xlu0 %656, %v210
        %v658 = vpop.permute.xlu0 %657
        %660 = vset.pattern.permute.xlu0 1
        %661 = vperm.xlu0 %660, %v211
        %v662 = vpop.permute.xlu0 %661
        %664 = vset.pattern.permute.xlu0 1
        %665 = vperm.xlu0 %664, %v212
        %v666 = vpop.permute.xlu0 %665
        %668 = vset.pattern.permute.xlu0 1
        %669 = vperm.xlu0 %668, %v213
        %v670 = vpop.permute.xlu0 %669
        %672 = vset.pattern.permute.xlu0 1
        %673 = vperm.xlu0 %672, %v214
        %v674 = vpop.permute.xlu0 %673
        %676 = vset.pattern.permute.xlu0 1
        %677 = vperm.xlu0 %676, %v215
        %v678 = vpop.permute.xlu0 %677
        %680 = vset.pattern.permute.xlu0 1
        %681 = vperm.xlu0 %680, %v216
        %v682 = vpop.permute.xlu0 %681
        %684 = vset.pattern.permute.xlu0 1
        %685 = vperm.xlu0 %684, %v217
        %v686 = vpop.permute.xlu0 %685
        %688 = vset.pattern.permute.xlu0 1
        %689 = vperm.xlu0 %688, %v218
        %v690 = vpop.permute.xlu0 %689
        %692 = vset.pattern.permute.xlu0 1
        %693 = vperm.xlu0 %692, %v219
        %v694 = vpop.permute.xlu0 %693
        %696 = vset.pattern.permute.xlu0 1
        %697 = vperm.xlu0 %696, %v220
        %v698 = vpop.permute.xlu0 %697
        %700 = vset.pattern.permute.xlu0 1
        %701 = vperm.xlu0 %700, %v221
        %v702 = vpop.permute.xlu0 %701
        %v706 = vlaneseq
        %v707 = vshrl.u32 %v706, 7
        %v708 = vsub.s32 0, %v707
        %v709 = vrot.slane %v203, %v708
        %v710 = vlaneseq
        %v711 = vshrl.u32 %v710, 7
        %v712 = vsub.s32 1, %v711
        %v713 = vrot.slane %v203, %v712
        %v714 = vlaneseq
        %v715 = vshrl.u32 %v714, 7
        %v716 = vsub.s32 2, %v715
        %v717 = vrot.slane %v203, %v716
        %v718 = vlaneseq
        %v719 = vshrl.u32 %v718, 7
        %v720 = vsub.s32 3, %v719
        %v721 = vrot.slane %v203, %v720
        %v722 = vlaneseq
        %v723 = vshrl.u32 %v722, 7
        %v724 = vsub.s32 4, %v723
        %v725 = vrot.slane %v203, %v724
        %v726 = vlaneseq
        %v727 = vshrl.u32 %v726, 7
        %v728 = vsub.s32 5, %v727
        %v729 = vrot.slane %v203, %v728
        %v730 = vlaneseq
        %v731 = vshrl.u32 %v730, 7
        %v732 = vsub.s32 6, %v731
        %v733 = vrot.slane %v203, %v732
        %v734 = vlaneseq
        %v735 = vshrl.u32 %v734, 7
        %v736 = vsub.s32 7, %v735
        %v737 = vrot.slane %v203, %v736
        %v738 = vlaneseq
        %v739 = vshrl.u32 %v738, 7
        %v740 = vsub.s32 0, %v739
        %v741 = vrot.slane %v205, %v740
        %v742 = vlaneseq
        %v743 = vshrl.u32 %v742, 7
        %v744 = vsub.s32 1, %v743
        %v745 = vrot.slane %v205, %v744
        %v746 = vlaneseq
        %v747 = vshrl.u32 %v746, 7
        %v748 = vsub.s32 2, %v747
        %v749 = vrot.slane %v205, %v748
        %v750 = vlaneseq
        %v751 = vshrl.u32 %v750, 7
        %v752 = vsub.s32 3, %v751
        %v753 = vrot.slane %v205, %v752
        %v754 = vlaneseq
        %v755 = vshrl.u32 %v754, 7
        %v756 = vsub.s32 4, %v755
        %v757 = vrot.slane %v205, %v756
        %v758 = vlaneseq
        %v759 = vshrl.u32 %v758, 7
        %v760 = vsub.s32 5, %v759
        %v761 = vrot.slane %v205, %v760
        %v762 = vlaneseq
        %v763 = vshrl.u32 %v762, 7
        %v764 = vsub.s32 6, %v763
        %v765 = vrot.slane %v205, %v764
        %v766 = vlaneseq
        %v767 = vshrl.u32 %v766, 7
        %v768 = vsub.s32 7, %v767
        %v769 = vrot.slane %v205, %v768
        %v786 = vmul.f32 %v642, %v709
        %v787 = vmul.f32 %v642, %v713
        %v788 = vmul.f32 %v642, %v717
        %v789 = vmul.f32 %v642, %v721
        %v790 = vmul.f32 %v642, %v725
        %v791 = vmul.f32 %v642, %v729
        %v792 = vmul.f32 %v642, %v733
        %v793 = vmul.f32 %v642, %v737
        %v794 = vmul.f32 %v642, %v741
        %v795 = vmul.f32 %v642, %v745
        %v796 = vmul.f32 %v642, %v749
        %v797 = vmul.f32 %v642, %v753
        %v798 = vmul.f32 %v642, %v757
        %v799 = vmul.f32 %v642, %v761
        %v800 = vmul.f32 %v642, %v765
        %v801 = vmul.f32 %v642, %v769
        %v802 = vmul.f32 %v646, %v709
        %v803 = vmul.f32 %v646, %v713
        %v804 = vmul.f32 %v646, %v717
        %v805 = vmul.f32 %v646, %v721
        %v806 = vmul.f32 %v646, %v725
        %v807 = vmul.f32 %v646, %v729
        %v808 = vmul.f32 %v646, %v733
        %v809 = vmul.f32 %v646, %v737
        %v810 = vmul.f32 %v646, %v741
        %v811 = vmul.f32 %v646, %v745
        %v812 = vmul.f32 %v646, %v749
        %v813 = vmul.f32 %v646, %v753
        %v814 = vmul.f32 %v646, %v757
        %v815 = vmul.f32 %v646, %v761
        %v816 = vmul.f32 %v646, %v765
        %v817 = vmul.f32 %v646, %v769
        %v818 = vmul.f32 %v650, %v709
        %v819 = vmul.f32 %v650, %v713
        %v820 = vmul.f32 %v650, %v717
        %v821 = vmul.f32 %v650, %v721
        %v822 = vmul.f32 %v650, %v725
        %v823 = vmul.f32 %v650, %v729
        %v824 = vmul.f32 %v650, %v733
        %v825 = vmul.f32 %v650, %v737
        %v826 = vmul.f32 %v650, %v741
        %v827 = vmul.f32 %v650, %v745
        %v828 = vmul.f32 %v650, %v749
        %v829 = vmul.f32 %v650, %v753
        %v830 = vmul.f32 %v650, %v757
        %v831 = vmul.f32 %v650, %v761
        %v832 = vmul.f32 %v650, %v765
        %v833 = vmul.f32 %v650, %v769
        %v834 = vmul.f32 %v654, %v709
        %v835 = vmul.f32 %v654, %v713
        %v836 = vmul.f32 %v654, %v717
        %v837 = vmul.f32 %v654, %v721
        %v838 = vmul.f32 %v654, %v725
        %v839 = vmul.f32 %v654, %v729
        %v840 = vmul.f32 %v654, %v733
        %v841 = vmul.f32 %v654, %v737
        %v842 = vmul.f32 %v654, %v741
        %v843 = vmul.f32 %v654, %v745
        %v844 = vmul.f32 %v654, %v749
        %v845 = vmul.f32 %v654, %v753
        %v846 = vmul.f32 %v654, %v757
        %v847 = vmul.f32 %v654, %v761
        %v848 = vmul.f32 %v654, %v765
        %v849 = vmul.f32 %v654, %v769
        %v850 = vmul.f32 %v658, %v709
        %v851 = vmul.f32 %v658, %v713
        %v852 = vmul.f32 %v658, %v717
        %v853 = vmul.f32 %v658, %v721
        %v854 = vmul.f32 %v658, %v725
        %v855 = vmul.f32 %v658, %v729
        %v856 = vmul.f32 %v658, %v733
        %v857 = vmul.f32 %v658, %v737
        %v858 = vmul.f32 %v658, %v741
        %v859 = vmul.f32 %v658, %v745
        %v860 = vmul.f32 %v658, %v749
        %v861 = vmul.f32 %v658, %v753
        %v862 = vmul.f32 %v658, %v757
        %v863 = vmul.f32 %v658, %v761
        %v864 = vmul.f32 %v658, %v765
        %v865 = vmul.f32 %v658, %v769
        %v866 = vmul.f32 %v662, %v709
        %v867 = vmul.f32 %v662, %v713
        %v868 = vmul.f32 %v662, %v717
        %v869 = vmul.f32 %v662, %v721
        %v870 = vmul.f32 %v662, %v725
        %v871 = vmul.f32 %v662, %v729
        %v872 = vmul.f32 %v662, %v733
        %v873 = vmul.f32 %v662, %v737
        %v874 = vmul.f32 %v662, %v741
        %v875 = vmul.f32 %v662, %v745
        %v876 = vmul.f32 %v662, %v749
        %v877 = vmul.f32 %v662, %v753
        %v878 = vmul.f32 %v662, %v757
        %v879 = vmul.f32 %v662, %v761
        %v880 = vmul.f32 %v662, %v765
        %v881 = vmul.f32 %v662, %v769
        %v882 = vmul.f32 %v666, %v709
        %v883 = vmul.f32 %v666, %v713
        %v884 = vmul.f32 %v666, %v717
        %v885 = vmul.f32 %v666, %v721
        %v886 = vmul.f32 %v666, %v725
        %v887 = vmul.f32 %v666, %v729
        %v888 = vmul.f32 %v666, %v733
        %v889 = vmul.f32 %v666, %v737
        %v890 = vmul.f32 %v666, %v741
        %v891 = vmul.f32 %v666, %v745
        %v892 = vmul.f32 %v666, %v749
        %v893 = vmul.f32 %v666, %v753
        %v894 = vmul.f32 %v666, %v757
        %v895 = vmul.f32 %v666, %v761
        %v896 = vmul.f32 %v666, %v765
        %v897 = vmul.f32 %v666, %v769
        %v898 = vmul.f32 %v670, %v709
        %v899 = vmul.f32 %v670, %v713
        %v900 = vmul.f32 %v670, %v717
        %v901 = vmul.f32 %v670, %v721
        %v902 = vmul.f32 %v670, %v725
        %v903 = vmul.f32 %v670, %v729
        %v904 = vmul.f32 %v670, %v733
        %v905 = vmul.f32 %v670, %v737
        %v906 = vmul.f32 %v670, %v741
        %v907 = vmul.f32 %v670, %v745
        %v908 = vmul.f32 %v670, %v749
        %v909 = vmul.f32 %v670, %v753
        %v910 = vmul.f32 %v670, %v757
        %v911 = vmul.f32 %v670, %v761
        %v912 = vmul.f32 %v670, %v765
        %v913 = vmul.f32 %v670, %v769
        %v914 = vmul.f32 %v674, %v709
        %v915 = vmul.f32 %v674, %v713
        %v916 = vmul.f32 %v674, %v717
        %v917 = vmul.f32 %v674, %v721
        %v918 = vmul.f32 %v674, %v725
        %v919 = vmul.f32 %v674, %v729
        %v920 = vmul.f32 %v674, %v733
        %v921 = vmul.f32 %v674, %v737
        %v922 = vmul.f32 %v674, %v741
        %v923 = vmul.f32 %v674, %v745
        %v924 = vmul.f32 %v674, %v749
        %v925 = vmul.f32 %v674, %v753
        %v926 = vmul.f32 %v674, %v757
        %v927 = vmul.f32 %v674, %v761
        %v928 = vmul.f32 %v674, %v765
        %v929 = vmul.f32 %v674, %v769
        %v930 = vmul.f32 %v678, %v709
        %v931 = vmul.f32 %v678, %v713
        %v932 = vmul.f32 %v678, %v717
        %v933 = vmul.f32 %v678, %v721
        %v934 = vmul.f32 %v678, %v725
        %v935 = vmul.f32 %v678, %v729
        %v936 = vmul.f32 %v678, %v733
        %v937 = vmul.f32 %v678, %v737
        %v938 = vmul.f32 %v678, %v741
        %v939 = vmul.f32 %v678, %v745
        %v940 = vmul.f32 %v678, %v749
        %v941 = vmul.f32 %v678, %v753
        %v942 = vmul.f32 %v678, %v757
        %v943 = vmul.f32 %v678, %v761
        %v944 = vmul.f32 %v678, %v765
        %v945 = vmul.f32 %v678, %v769
        %v946 = vmul.f32 %v682, %v709
        %v947 = vmul.f32 %v682, %v713
        %v948 = vmul.f32 %v682, %v717
        %v949 = vmul.f32 %v682, %v721
        %v950 = vmul.f32 %v682, %v725
        %v951 = vmul.f32 %v682, %v729
        %v952 = vmul.f32 %v682, %v733
        %v953 = vmul.f32 %v682, %v737
        %v954 = vmul.f32 %v682, %v741
        %v955 = vmul.f32 %v682, %v745
        %v956 = vmul.f32 %v682, %v749
        %v957 = vmul.f32 %v682, %v753
        %v958 = vmul.f32 %v682, %v757
        %v959 = vmul.f32 %v682, %v761
        %v960 = vmul.f32 %v682, %v765
        %v961 = vmul.f32 %v682, %v769
        %v962 = vmul.f32 %v686, %v709
        %v963 = vmul.f32 %v686, %v713
        %v964 = vmul.f32 %v686, %v717
        %v965 = vmul.f32 %v686, %v721
        %v966 = vmul.f32 %v686, %v725
        %v967 = vmul.f32 %v686, %v729
        %v968 = vmul.f32 %v686, %v733
        %v969 = vmul.f32 %v686, %v737
        %v970 = vmul.f32 %v686, %v741
        %v971 = vmul.f32 %v686, %v745
        %v972 = vmul.f32 %v686, %v749
        %v973 = vmul.f32 %v686, %v753
        %v974 = vmul.f32 %v686, %v757
        %v975 = vmul.f32 %v686, %v761
        %v976 = vmul.f32 %v686, %v765
        %v977 = vmul.f32 %v686, %v769
        %v978 = vmul.f32 %v690, %v709
        %v979 = vmul.f32 %v690, %v713
        %v980 = vmul.f32 %v690, %v717
        %v981 = vmul.f32 %v690, %v721
        %v982 = vmul.f32 %v690, %v725
        %v983 = vmul.f32 %v690, %v729
        %v984 = vmul.f32 %v690, %v733
        %v985 = vmul.f32 %v690, %v737
        %v986 = vmul.f32 %v690, %v741
        %v987 = vmul.f32 %v690, %v745
        %v988 = vmul.f32 %v690, %v749
        %v989 = vmul.f32 %v690, %v753
        %v990 = vmul.f32 %v690, %v757
        %v991 = vmul.f32 %v690, %v761
        %v992 = vmul.f32 %v690, %v765
        %v993 = vmul.f32 %v690, %v769
        %v994 = vmul.f32 %v694, %v709
        %v995 = vmul.f32 %v694, %v713
        %v996 = vmul.f32 %v694, %v717
        %v997 = vmul.f32 %v694, %v721
        %v998 = vmul.f32 %v694, %v725
        %v999 = vmul.f32 %v694, %v729
        %v1000 = vmul.f32 %v694, %v733
        %v1001 = vmul.f32 %v694, %v737
        %v1002 = vmul.f32 %v694, %v741
        %v1003 = vmul.f32 %v694, %v745
        %v1004 = vmul.f32 %v694, %v749
        %v1005 = vmul.f32 %v694, %v753
        %v1006 = vmul.f32 %v694, %v757
        %v1007 = vmul.f32 %v694, %v761
        %v1008 = vmul.f32 %v694, %v765
        %v1009 = vmul.f32 %v694, %v769
        %v1010 = vmul.f32 %v698, %v709
        %v1011 = vmul.f32 %v698, %v713
        %v1012 = vmul.f32 %v698, %v717
        %v1013 = vmul.f32 %v698, %v721
        %v1014 = vmul.f32 %v698, %v725
        %v1015 = vmul.f32 %v698, %v729
        %v1016 = vmul.f32 %v698, %v733
        %v1017 = vmul.f32 %v698, %v737
        %v1018 = vmul.f32 %v698, %v741
        %v1019 = vmul.f32 %v698, %v745
        %v1020 = vmul.f32 %v698, %v749
        %v1021 = vmul.f32 %v698, %v753
        %v1022 = vmul.f32 %v698, %v757
        %v1023 = vmul.f32 %v698, %v761
        %v1024 = vmul.f32 %v698, %v765
        %v1025 = vmul.f32 %v698, %v769
        %v1026 = vmul.f32 %v702, %v709
        %v1027 = vmul.f32 %v702, %v713
        %v1028 = vmul.f32 %v702, %v717
        %v1029 = vmul.f32 %v702, %v721
        %v1030 = vmul.f32 %v702, %v725
        %v1031 = vmul.f32 %v702, %v729
        %v1032 = vmul.f32 %v702, %v733
        %v1033 = vmul.f32 %v702, %v737
        %v1034 = vmul.f32 %v702, %v741
        %v1035 = vmul.f32 %v702, %v745
        %v1036 = vmul.f32 %v702, %v749
        %v1037 = vmul.f32 %v702, %v753
        %v1038 = vmul.f32 %v702, %v757
        %v1039 = vmul.f32 %v702, %v761
        %v1040 = vmul.f32 %v702, %v765
        %v1041 = vmul.f32 %v702, %v769
        %v1042 = vadd.f32 %v384, %v786
        %v1043 = vadd.f32 %v385, %v787
        %v1044 = vadd.f32 %v386, %v788
        %v1045 = vadd.f32 %v387, %v789
        %v1046 = vadd.f32 %v388, %v790
        %v1047 = vadd.f32 %v389, %v791
        %v1048 = vadd.f32 %v390, %v792
        %v1049 = vadd.f32 %v391, %v793
        %v1050 = vadd.f32 %v392, %v794
        %v1051 = vadd.f32 %v393, %v795
        %v1052 = vadd.f32 %v394, %v796
        %v1053 = vadd.f32 %v395, %v797
        %v1054 = vadd.f32 %v396, %v798
        %v1055 = vadd.f32 %v397, %v799
        %v1056 = vadd.f32 %v398, %v800
        %v1057 = vadd.f32 %v399, %v801
        %v1058 = vadd.f32 %v400, %v802
        %v1059 = vadd.f32 %v401, %v803
        %v1060 = vadd.f32 %v402, %v804
        %v1061 = vadd.f32 %v403, %v805
        %v1062 = vadd.f32 %v404, %v806
        %v1063 = vadd.f32 %v405, %v807
        %v1064 = vadd.f32 %v406, %v808
        %v1065 = vadd.f32 %v407, %v809
        %v1066 = vadd.f32 %v408, %v810
        %v1067 = vadd.f32 %v409, %v811
        %v1068 = vadd.f32 %v410, %v812
        %v1069 = vadd.f32 %v411, %v813
        %v1070 = vadd.f32 %v412, %v814
        %v1071 = vadd.f32 %v413, %v815
        %v1072 = vadd.f32 %v414, %v816
        %v1073 = vadd.f32 %v415, %v817
        %v1074 = vadd.f32 %v416, %v818
        %v1075 = vadd.f32 %v417, %v819
        %v1076 = vadd.f32 %v418, %v820
        %v1077 = vadd.f32 %v419, %v821
        %v1078 = vadd.f32 %v420, %v822
        %v1079 = vadd.f32 %v421, %v823
        %v1080 = vadd.f32 %v422, %v824
        %v1081 = vadd.f32 %v423, %v825
        %v1082 = vadd.f32 %v424, %v826
        %v1083 = vadd.f32 %v425, %v827
        %v1084 = vadd.f32 %v426, %v828
        %v1085 = vadd.f32 %v427, %v829
        %v1086 = vadd.f32 %v428, %v830
        %v1087 = vadd.f32 %v429, %v831
        %v1088 = vadd.f32 %v430, %v832
        %v1089 = vadd.f32 %v431, %v833
        %v1090 = vadd.f32 %v432, %v834
        %v1091 = vadd.f32 %v433, %v835
        %v1092 = vadd.f32 %v434, %v836
        %v1093 = vadd.f32 %v435, %v837
        %v1094 = vadd.f32 %v436, %v838
        %v1095 = vadd.f32 %v437, %v839
        %v1096 = vadd.f32 %v438, %v840
        %v1097 = vadd.f32 %v439, %v841
        %v1098 = vadd.f32 %v440, %v842
        %v1099 = vadd.f32 %v441, %v843
        %v1100 = vadd.f32 %v442, %v844
        %v1101 = vadd.f32 %v443, %v845
        %v1102 = vadd.f32 %v444, %v846
        %v1103 = vadd.f32 %v445, %v847
        %v1104 = vadd.f32 %v446, %v848
        %v1105 = vadd.f32 %v447, %v849
        %v1106 = vadd.f32 %v448, %v850
        %v1107 = vadd.f32 %v449, %v851
        %v1108 = vadd.f32 %v450, %v852
        %v1109 = vadd.f32 %v451, %v853
        %v1110 = vadd.f32 %v452, %v854
        %v1111 = vadd.f32 %v453, %v855
        %v1112 = vadd.f32 %v454, %v856
        %v1113 = vadd.f32 %v455, %v857
        %v1114 = vadd.f32 %v456, %v858
        %v1115 = vadd.f32 %v457, %v859
        %v1116 = vadd.f32 %v458, %v860
        %v1117 = vadd.f32 %v459, %v861
        %v1118 = vadd.f32 %v460, %v862
        %v1119 = vadd.f32 %v461, %v863
        %v1120 = vadd.f32 %v462, %v864
        %v1121 = vadd.f32 %v463, %v865
        %v1122 = vadd.f32 %v464, %v866
        %v1123 = vadd.f32 %v465, %v867
        %v1124 = vadd.f32 %v466, %v868
        %v1125 = vadd.f32 %v467, %v869
        %v1126 = vadd.f32 %v468, %v870
        %v1127 = vadd.f32 %v469, %v871
        %v1128 = vadd.f32 %v470, %v872
        %v1129 = vadd.f32 %v471, %v873
        %v1130 = vadd.f32 %v472, %v874
        %v1131 = vadd.f32 %v473, %v875
        %v1132 = vadd.f32 %v474, %v876
        %v1133 = vadd.f32 %v475, %v877
        %v1134 = vadd.f32 %v476, %v878
        %v1135 = vadd.f32 %v477, %v879
        %v1136 = vadd.f32 %v478, %v880
        %v1137 = vadd.f32 %v479, %v881
        %v1138 = vadd.f32 %v480, %v882
        %v1139 = vadd.f32 %v481, %v883
        %v1140 = vadd.f32 %v482, %v884
        %v1141 = vadd.f32 %v483, %v885
        %v1142 = vadd.f32 %v484, %v886
        %v1143 = vadd.f32 %v485, %v887
        %v1144 = vadd.f32 %v486, %v888
        %v1145 = vadd.f32 %v487, %v889
        %v1146 = vadd.f32 %v488, %v890
        %v1147 = vadd.f32 %v489, %v891
        %v1148 = vadd.f32 %v490, %v892
        %v1149 = vadd.f32 %v491, %v893
        %v1150 = vadd.f32 %v492, %v894
        %v1151 = vadd.f32 %v493, %v895
        %v1152 = vadd.f32 %v494, %v896
        %v1153 = vadd.f32 %v495, %v897
        %v1154 = vadd.f32 %v496, %v898
        %v1155 = vadd.f32 %v497, %v899
        %v1156 = vadd.f32 %v498, %v900
        %v1157 = vadd.f32 %v499, %v901
        %v1158 = vadd.f32 %v500, %v902
        %v1159 = vadd.f32 %v501, %v903
        %v1160 = vadd.f32 %v502, %v904
        %v1161 = vadd.f32 %v503, %v905
        %v1162 = vadd.f32 %v504, %v906
        %v1163 = vadd.f32 %v505, %v907
        %v1164 = vadd.f32 %v506, %v908
        %v1165 = vadd.f32 %v507, %v909
        %v1166 = vadd.f32 %v508, %v910
        %v1167 = vadd.f32 %v509, %v911
        %v1168 = vadd.f32 %v510, %v912
        %v1169 = vadd.f32 %v511, %v913
        %v1170 = vadd.f32 %v512, %v914
        %v1171 = vadd.f32 %v513, %v915
        %v1172 = vadd.f32 %v514, %v916
        %v1173 = vadd.f32 %v515, %v917
        %v1174 = vadd.f32 %v516, %v918
        %v1175 = vadd.f32 %v517, %v919
        %v1176 = vadd.f32 %v518, %v920
        %v1177 = vadd.f32 %v519, %v921
        %v1178 = vadd.f32 %v520, %v922
        %v1179 = vadd.f32 %v521, %v923
        %v1180 = vadd.f32 %v522, %v924
        %v1181 = vadd.f32 %v523, %v925
        %v1182 = vadd.f32 %v524, %v926
        %v1183 = vadd.f32 %v525, %v927
        %v1184 = vadd.f32 %v526, %v928
        %v1185 = vadd.f32 %v527, %v929
        %v1186 = vadd.f32 %v528, %v930
        %v1187 = vadd.f32 %v529, %v931
        %v1188 = vadd.f32 %v530, %v932
        %v1189 = vadd.f32 %v531, %v933
        %v1190 = vadd.f32 %v532, %v934
        %v1191 = vadd.f32 %v533, %v935
        %v1192 = vadd.f32 %v534, %v936
        %v1193 = vadd.f32 %v535, %v937
        %v1194 = vadd.f32 %v536, %v938
        %v1195 = vadd.f32 %v537, %v939
        %v1196 = vadd.f32 %v538, %v940
        %v1197 = vadd.f32 %v539, %v941
        %v1198 = vadd.f32 %v540, %v942
        %v1199 = vadd.f32 %v541, %v943
        %v1200 = vadd.f32 %v542, %v944
        %v1201 = vadd.f32 %v543, %v945
        %v1202 = vadd.f32 %v544, %v946
        %v1203 = vadd.f32 %v545, %v947
        %v1204 = vadd.f32 %v546, %v948
        %v1205 = vadd.f32 %v547, %v949
        %v1206 = vadd.f32 %v548, %v950
        %v1207 = vadd.f32 %v549, %v951
        %v1208 = vadd.f32 %v550, %v952
        %v1209 = vadd.f32 %v551, %v953
        %v1210 = vadd.f32 %v552, %v954
        %v1211 = vadd.f32 %v553, %v955
        %v1212 = vadd.f32 %v554, %v956
        %v1213 = vadd.f32 %v555, %v957
        %v1214 = vadd.f32 %v556, %v958
        %v1215 = vadd.f32 %v557, %v959
        %v1216 = vadd.f32 %v558, %v960
        %v1217 = vadd.f32 %v559, %v961
        %v1218 = vadd.f32 %v560, %v962
        %v1219 = vadd.f32 %v561, %v963
        %v1220 = vadd.f32 %v562, %v964
        %v1221 = vadd.f32 %v563, %v965
        %v1222 = vadd.f32 %v564, %v966
        %v1223 = vadd.f32 %v565, %v967
        %v1224 = vadd.f32 %v566, %v968
        %v1225 = vadd.f32 %v567, %v969
        %v1226 = vadd.f32 %v568, %v970
        %v1227 = vadd.f32 %v569, %v971
        %v1228 = vadd.f32 %v570, %v972
        %v1229 = vadd.f32 %v571, %v973
        %v1230 = vadd.f32 %v572, %v974
        %v1231 = vadd.f32 %v573, %v975
        %v1232 = vadd.f32 %v574, %v976
        %v1233 = vadd.f32 %v575, %v977
        %v1234 = vadd.f32 %v576, %v978
        %v1235 = vadd.f32 %v577, %v979
        %v1236 = vadd.f32 %v578, %v980
        %v1237 = vadd.f32 %v579, %v981
        %v1238 = vadd.f32 %v580, %v982
        %v1239 = vadd.f32 %v581, %v983
        %v1240 = vadd.f32 %v582, %v984
        %v1241 = vadd.f32 %v583, %v985
        %v1242 = vadd.f32 %v584, %v986
        %v1243 = vadd.f32 %v585, %v987
        %v1244 = vadd.f32 %v586, %v988
        %v1245 = vadd.f32 %v587, %v989
        %v1246 = vadd.f32 %v588, %v990
        %v1247 = vadd.f32 %v589, %v991
        %v1248 = vadd.f32 %v590, %v992
        %v1249 = vadd.f32 %v591, %v993
        %v1250 = vadd.f32 %v592, %v994
        %v1251 = vadd.f32 %v593, %v995
        %v1252 = vadd.f32 %v594, %v996
        %v1253 = vadd.f32 %v595, %v997
        %v1254 = vadd.f32 %v596, %v998
        %v1255 = vadd.f32 %v597, %v999
        %v1256 = vadd.f32 %v598, %v1000
        %v1257 = vadd.f32 %v599, %v1001
        %v1258 = vadd.f32 %v600, %v1002
        %v1259 = vadd.f32 %v601, %v1003
        %v1260 = vadd.f32 %v602, %v1004
        %v1261 = vadd.f32 %v603, %v1005
        %v1262 = vadd.f32 %v604, %v1006
        %v1263 = vadd.f32 %v605, %v1007
        %v1264 = vadd.f32 %v606, %v1008
        %v1265 = vadd.f32 %v607, %v1009
        %v1266 = vadd.f32 %v608, %v1010
        %v1267 = vadd.f32 %v609, %v1011
        %v1268 = vadd.f32 %v610, %v1012
        %v1269 = vadd.f32 %v611, %v1013
        %v1270 = vadd.f32 %v612, %v1014
        %v1271 = vadd.f32 %v613, %v1015
        %v1272 = vadd.f32 %v614, %v1016
        %v1273 = vadd.f32 %v615, %v1017
        %v1274 = vadd.f32 %v616, %v1018
        %v1275 = vadd.f32 %v617, %v1019
        %v1276 = vadd.f32 %v618, %v1020
        %v1277 = vadd.f32 %v619, %v1021
        %v1278 = vadd.f32 %v620, %v1022
        %v1279 = vadd.f32 %v621, %v1023
        %v1280 = vadd.f32 %v622, %v1024
        %v1281 = vadd.f32 %v623, %v1025
        %v1282 = vadd.f32 %v624, %v1026
        %v1283 = vadd.f32 %v625, %v1027
        %v1284 = vadd.f32 %v626, %v1028
        %v1285 = vadd.f32 %v627, %v1029
        %v1286 = vadd.f32 %v628, %v1030
        %v1287 = vadd.f32 %v629, %v1031
        %v1288 = vadd.f32 %v630, %v1032
        %v1289 = vadd.f32 %v631, %v1033
        %v1290 = vadd.f32 %v632, %v1034
        %v1291 = vadd.f32 %v633, %v1035
        %v1292 = vadd.f32 %v634, %v1036
        %v1293 = vadd.f32 %v635, %v1037
        %v1294 = vadd.f32 %v636, %v1038
        %v1295 = vadd.f32 %v637, %v1039
        %v1296 = vadd.f32 %v638, %v1040
        %v1297 = vadd.f32 %v639, %v1041
        %v1298 = vld [vmem:[%s2] sm:$0xff]
        %v1299 = vld [vmem:[%s2 + $0x8] sm:$0xff]
        %v1300 = vld [vmem:[%s2 + $0x10] sm:$0xff]
        %v1301 = vld [vmem:[%s2 + $0x18] sm:$0xff]
        %v1302 = vld [vmem:[%s2 + $0x20] sm:$0xff]
        %v1303 = vld [vmem:[%s2 + $0x28] sm:$0xff]
        %v1304 = vld [vmem:[%s2 + $0x30] sm:$0xff]
        %v1305 = vld [vmem:[%s2 + $0x38] sm:$0xff]
        %v1306 = vld [vmem:[%s2 + $0x40] sm:$0xff]
        %v1307 = vld [vmem:[%s2 + $0x48] sm:$0xff]
        %v1308 = vld [vmem:[%s2 + $0x50] sm:$0xff]
        %v1309 = vld [vmem:[%s2 + $0x58] sm:$0xff]
        %v1310 = vld [vmem:[%s2 + $0x60] sm:$0xff]
        %v1311 = vld [vmem:[%s2 + $0x68] sm:$0xff]
        %v1312 = vld [vmem:[%s2 + $0x70] sm:$0xff]
        %v1313 = vld [vmem:[%s2 + $0x78] sm:$0xff]
        %1315 = vset.pattern.permute.xlu0 0
        %1316 = vperm.xlu0 %1315, %v1298
        %v1317 = vpop.permute.xlu0 %1316
        %1320 = vset.pattern.permute.xlu0 0
        %1321 = vperm.xlu0 %1320, %v1299
        %v1322 = vpop.permute.xlu0 %1321
        %1325 = vset.pattern.permute.xlu0 0
        %1326 = vperm.xlu0 %1325, %v1300
        %v1327 = vpop.permute.xlu0 %1326
        %1330 = vset.pattern.permute.xlu0 0
        %1331 = vperm.xlu0 %1330, %v1301
        %v1332 = vpop.permute.xlu0 %1331
        %1335 = vset.pattern.permute.xlu0 0
        %1336 = vperm.xlu0 %1335, %v1302
        %v1337 = vpop.permute.xlu0 %1336
        %1340 = vset.pattern.permute.xlu0 0
        %1341 = vperm.xlu0 %1340, %v1303
        %v1342 = vpop.permute.xlu0 %1341
        %1345 = vset.pattern.permute.xlu0 0
        %1346 = vperm.xlu0 %1345, %v1304
        %v1347 = vpop.permute.xlu0 %1346
        %1350 = vset.pattern.permute.xlu0 0
        %1351 = vperm.xlu0 %1350, %v1305
        %v1352 = vpop.permute.xlu0 %1351
        %1355 = vset.pattern.permute.xlu0 0
        %1356 = vperm.xlu0 %1355, %v1306
        %v1357 = vpop.permute.xlu0 %1356
        %1360 = vset.pattern.permute.xlu0 0
        %1361 = vperm.xlu0 %1360, %v1307
        %v1362 = vpop.permute.xlu0 %1361
        %1365 = vset.pattern.permute.xlu0 0
        %1366 = vperm.xlu0 %1365, %v1308
        %v1367 = vpop.permute.xlu0 %1366
        %1370 = vset.pattern.permute.xlu0 0
        %1371 = vperm.xlu0 %1370, %v1309
        %v1372 = vpop.permute.xlu0 %1371
        %1375 = vset.pattern.permute.xlu0 0
        %1376 = vperm.xlu0 %1375, %v1310
        %v1377 = vpop.permute.xlu0 %1376
        %1380 = vset.pattern.permute.xlu0 0
        %1381 = vperm.xlu0 %1380, %v1311
        %v1382 = vpop.permute.xlu0 %1381
        %1385 = vset.pattern.permute.xlu0 0
        %1386 = vperm.xlu0 %1385, %v1312
        %v1387 = vpop.permute.xlu0 %1386
        %1390 = vset.pattern.permute.xlu0 0
        %1391 = vperm.xlu0 %1390, %v1313
        %v1392 = vpop.permute.xlu0 %1391
        %v1394 = vadd.f32 %v1042, %v1317
        %v1395 = vadd.f32 %v1043, %v1317
        %v1396 = vadd.f32 %v1044, %v1317
        %v1397 = vadd.f32 %v1045, %v1317
        %v1398 = vadd.f32 %v1046, %v1317
        %v1399 = vadd.f32 %v1047, %v1317
        %v1400 = vadd.f32 %v1048, %v1317
        %v1401 = vadd.f32 %v1049, %v1317
        %v1402 = vadd.f32 %v1050, %v1317
        %v1403 = vadd.f32 %v1051, %v1317
        %v1404 = vadd.f32 %v1052, %v1317
        %v1405 = vadd.f32 %v1053, %v1317
        %v1406 = vadd.f32 %v1054, %v1317
        %v1407 = vadd.f32 %v1055, %v1317
        %v1408 = vadd.f32 %v1056, %v1317
        %v1409 = vadd.f32 %v1057, %v1317
        %v1410 = vadd.f32 %v1058, %v1322
        %v1411 = vadd.f32 %v1059, %v1322
        %v1412 = vadd.f32 %v1060, %v1322
        %v1413 = vadd.f32 %v1061, %v1322
        %v1414 = vadd.f32 %v1062, %v1322
        %v1415 = vadd.f32 %v1063, %v1322
        %v1416 = vadd.f32 %v1064, %v1322
        %v1417 = vadd.f32 %v1065, %v1322
        %v1418 = vadd.f32 %v1066, %v1322
        %v1419 = vadd.f32 %v1067, %v1322
        %v1420 = vadd.f32 %v1068, %v1322
        %v1421 = vadd.f32 %v1069, %v1322
        %v1422 = vadd.f32 %v1070, %v1322
        %v1423 = vadd.f32 %v1071, %v1322
        %v1424 = vadd.f32 %v1072, %v1322
        %v1425 = vadd.f32 %v1073, %v1322
        %v1426 = vadd.f32 %v1074, %v1327
        %v1427 = vadd.f32 %v1075, %v1327
        %v1428 = vadd.f32 %v1076, %v1327
        %v1429 = vadd.f32 %v1077, %v1327
        %v1430 = vadd.f32 %v1078, %v1327
        %v1431 = vadd.f32 %v1079, %v1327
        %v1432 = vadd.f32 %v1080, %v1327
        %v1433 = vadd.f32 %v1081, %v1327
        %v1434 = vadd.f32 %v1082, %v1327
        %v1435 = vadd.f32 %v1083, %v1327
        %v1436 = vadd.f32 %v1084, %v1327
        %v1437 = vadd.f32 %v1085, %v1327
        %v1438 = vadd.f32 %v1086, %v1327
        %v1439 = vadd.f32 %v1087, %v1327
        %v1440 = vadd.f32 %v1088, %v1327
        %v1441 = vadd.f32 %v1089, %v1327
        %v1442 = vadd.f32 %v1090, %v1332
        %v1443 = vadd.f32 %v1091, %v1332
        %v1444 = vadd.f32 %v1092, %v1332
        %v1445 = vadd.f32 %v1093, %v1332
        %v1446 = vadd.f32 %v1094, %v1332
        %v1447 = vadd.f32 %v1095, %v1332
        %v1448 = vadd.f32 %v1096, %v1332
        %v1449 = vadd.f32 %v1097, %v1332
        %v1450 = vadd.f32 %v1098, %v1332
        %v1451 = vadd.f32 %v1099, %v1332
        %v1452 = vadd.f32 %v1100, %v1332
        %v1453 = vadd.f32 %v1101, %v1332
        %v1454 = vadd.f32 %v1102, %v1332
        %v1455 = vadd.f32 %v1103, %v1332
        %v1456 = vadd.f32 %v1104, %v1332
        %v1457 = vadd.f32 %v1105, %v1332
        %v1458 = vadd.f32 %v1106, %v1337
        %v1459 = vadd.f32 %v1107, %v1337
        %v1460 = vadd.f32 %v1108, %v1337
        %v1461 = vadd.f32 %v1109, %v1337
        %v1462 = vadd.f32 %v1110, %v1337
        %v1463 = vadd.f32 %v1111, %v1337
        %v1464 = vadd.f32 %v1112, %v1337
        %v1465 = vadd.f32 %v1113, %v1337
        %v1466 = vadd.f32 %v1114, %v1337
        %v1467 = vadd.f32 %v1115, %v1337
        %v1468 = vadd.f32 %v1116, %v1337
        %v1469 = vadd.f32 %v1117, %v1337
        %v1470 = vadd.f32 %v1118, %v1337
        %v1471 = vadd.f32 %v1119, %v1337
        %v1472 = vadd.f32 %v1120, %v1337
        %v1473 = vadd.f32 %v1121, %v1337
        %v1474 = vadd.f32 %v1122, %v1342
        %v1475 = vadd.f32 %v1123, %v1342
        %v1476 = vadd.f32 %v1124, %v1342
        %v1477 = vadd.f32 %v1125, %v1342
        %v1478 = vadd.f32 %v1126, %v1342
        %v1479 = vadd.f32 %v1127, %v1342
        %v1480 = vadd.f32 %v1128, %v1342
        %v1481 = vadd.f32 %v1129, %v1342
        %v1482 = vadd.f32 %v1130, %v1342
        %v1483 = vadd.f32 %v1131, %v1342
        %v1484 = vadd.f32 %v1132, %v1342
        %v1485 = vadd.f32 %v1133, %v1342
        %v1486 = vadd.f32 %v1134, %v1342
        %v1487 = vadd.f32 %v1135, %v1342
        %v1488 = vadd.f32 %v1136, %v1342
        %v1489 = vadd.f32 %v1137, %v1342
        %v1490 = vadd.f32 %v1138, %v1347
        %v1491 = vadd.f32 %v1139, %v1347
        %v1492 = vadd.f32 %v1140, %v1347
        %v1493 = vadd.f32 %v1141, %v1347
        %v1494 = vadd.f32 %v1142, %v1347
        %v1495 = vadd.f32 %v1143, %v1347
        %v1496 = vadd.f32 %v1144, %v1347
        %v1497 = vadd.f32 %v1145, %v1347
        %v1498 = vadd.f32 %v1146, %v1347
        %v1499 = vadd.f32 %v1147, %v1347
        %v1500 = vadd.f32 %v1148, %v1347
        %v1501 = vadd.f32 %v1149, %v1347
        %v1502 = vadd.f32 %v1150, %v1347
        %v1503 = vadd.f32 %v1151, %v1347
        %v1504 = vadd.f32 %v1152, %v1347
        %v1505 = vadd.f32 %v1153, %v1347
        %v1506 = vadd.f32 %v1154, %v1352
        %v1507 = vadd.f32 %v1155, %v1352
        %v1508 = vadd.f32 %v1156, %v1352
        %v1509 = vadd.f32 %v1157, %v1352
        %v1510 = vadd.f32 %v1158, %v1352
        %v1511 = vadd.f32 %v1159, %v1352
        %v1512 = vadd.f32 %v1160, %v1352
        %v1513 = vadd.f32 %v1161, %v1352
        %v1514 = vadd.f32 %v1162, %v1352
        %v1515 = vadd.f32 %v1163, %v1352
        %v1516 = vadd.f32 %v1164, %v1352
        %v1517 = vadd.f32 %v1165, %v1352
        %v1518 = vadd.f32 %v1166, %v1352
        %v1519 = vadd.f32 %v1167, %v1352
        %v1520 = vadd.f32 %v1168, %v1352
        %v1521 = vadd.f32 %v1169, %v1352
        %v1522 = vadd.f32 %v1170, %v1357
        %v1523 = vadd.f32 %v1171, %v1357
        %v1524 = vadd.f32 %v1172, %v1357
        %v1525 = vadd.f32 %v1173, %v1357
        %v1526 = vadd.f32 %v1174, %v1357
        %v1527 = vadd.f32 %v1175, %v1357
        %v1528 = vadd.f32 %v1176, %v1357
        %v1529 = vadd.f32 %v1177, %v1357
        %v1530 = vadd.f32 %v1178, %v1357
        %v1531 = vadd.f32 %v1179, %v1357
        %v1532 = vadd.f32 %v1180, %v1357
        %v1533 = vadd.f32 %v1181, %v1357
        %v1534 = vadd.f32 %v1182, %v1357
        %v1535 = vadd.f32 %v1183, %v1357
        %v1536 = vadd.f32 %v1184, %v1357
        %v1537 = vadd.f32 %v1185, %v1357
        %v1538 = vadd.f32 %v1186, %v1362
        %v1539 = vadd.f32 %v1187, %v1362
        %v1540 = vadd.f32 %v1188, %v1362
        %v1541 = vadd.f32 %v1189, %v1362
        %v1542 = vadd.f32 %v1190, %v1362
        %v1543 = vadd.f32 %v1191, %v1362
        %v1544 = vadd.f32 %v1192, %v1362
        %v1545 = vadd.f32 %v1193, %v1362
        %v1546 = vadd.f32 %v1194, %v1362
        %v1547 = vadd.f32 %v1195, %v1362
        %v1548 = vadd.f32 %v1196, %v1362
        %v1549 = vadd.f32 %v1197, %v1362
        %v1550 = vadd.f32 %v1198, %v1362
        %v1551 = vadd.f32 %v1199, %v1362
        %v1552 = vadd.f32 %v1200, %v1362
        %v1553 = vadd.f32 %v1201, %v1362
        %v1554 = vadd.f32 %v1202, %v1367
        %v1555 = vadd.f32 %v1203, %v1367
        %v1556 = vadd.f32 %v1204, %v1367
        %v1557 = vadd.f32 %v1205, %v1367
        %v1558 = vadd.f32 %v1206, %v1367
        %v1559 = vadd.f32 %v1207, %v1367
        %v1560 = vadd.f32 %v1208, %v1367
        %v1561 = vadd.f32 %v1209, %v1367
        %v1562 = vadd.f32 %v1210, %v1367
        %v1563 = vadd.f32 %v1211, %v1367
        %v1564 = vadd.f32 %v1212, %v1367
        %v1565 = vadd.f32 %v1213, %v1367
        %v1566 = vadd.f32 %v1214, %v1367
        %v1567 = vadd.f32 %v1215, %v1367
        %v1568 = vadd.f32 %v1216, %v1367
        %v1569 = vadd.f32 %v1217, %v1367
        %v1570 = vadd.f32 %v1218, %v1372
        %v1571 = vadd.f32 %v1219, %v1372
        %v1572 = vadd.f32 %v1220, %v1372
        %v1573 = vadd.f32 %v1221, %v1372
        %v1574 = vadd.f32 %v1222, %v1372
        %v1575 = vadd.f32 %v1223, %v1372
        %v1576 = vadd.f32 %v1224, %v1372
        %v1577 = vadd.f32 %v1225, %v1372
        %v1578 = vadd.f32 %v1226, %v1372
        %v1579 = vadd.f32 %v1227, %v1372
        %v1580 = vadd.f32 %v1228, %v1372
        %v1581 = vadd.f32 %v1229, %v1372
        %v1582 = vadd.f32 %v1230, %v1372
        %v1583 = vadd.f32 %v1231, %v1372
        %v1584 = vadd.f32 %v1232, %v1372
        %v1585 = vadd.f32 %v1233, %v1372
        %v1586 = vadd.f32 %v1234, %v1377
        %v1587 = vadd.f32 %v1235, %v1377
        %v1588 = vadd.f32 %v1236, %v1377
        %v1589 = vadd.f32 %v1237, %v1377
        %v1590 = vadd.f32 %v1238, %v1377
        %v1591 = vadd.f32 %v1239, %v1377
        %v1592 = vadd.f32 %v1240, %v1377
        %v1593 = vadd.f32 %v1241, %v1377
        %v1594 = vadd.f32 %v1242, %v1377
        %v1595 = vadd.f32 %v1243, %v1377
        %v1596 = vadd.f32 %v1244, %v1377
        %v1597 = vadd.f32 %v1245, %v1377
        %v1598 = vadd.f32 %v1246, %v1377
        %v1599 = vadd.f32 %v1247, %v1377
        %v1600 = vadd.f32 %v1248, %v1377
        %v1601 = vadd.f32 %v1249, %v1377
        %v1602 = vadd.f32 %v1250, %v1382
        %v1603 = vadd.f32 %v1251, %v1382
        %v1604 = vadd.f32 %v1252, %v1382
        %v1605 = vadd.f32 %v1253, %v1382
        %v1606 = vadd.f32 %v1254, %v1382
        %v1607 = vadd.f32 %v1255, %v1382
        %v1608 = vadd.f32 %v1256, %v1382
        %v1609 = vadd.f32 %v1257, %v1382
        %v1610 = vadd.f32 %v1258, %v1382
        %v1611 = vadd.f32 %v1259, %v1382
        %v1612 = vadd.f32 %v1260, %v1382
        %v1613 = vadd.f32 %v1261, %v1382
        %v1614 = vadd.f32 %v1262, %v1382
        %v1615 = vadd.f32 %v1263, %v1382
        %v1616 = vadd.f32 %v1264, %v1382
        %v1617 = vadd.f32 %v1265, %v1382
        %v1618 = vadd.f32 %v1266, %v1387
        %v1619 = vadd.f32 %v1267, %v1387
        %v1620 = vadd.f32 %v1268, %v1387
        %v1621 = vadd.f32 %v1269, %v1387
        %v1622 = vadd.f32 %v1270, %v1387
        %v1623 = vadd.f32 %v1271, %v1387
        %v1624 = vadd.f32 %v1272, %v1387
        %v1625 = vadd.f32 %v1273, %v1387
        %v1626 = vadd.f32 %v1274, %v1387
        %v1627 = vadd.f32 %v1275, %v1387
        %v1628 = vadd.f32 %v1276, %v1387
        %v1629 = vadd.f32 %v1277, %v1387
        %v1630 = vadd.f32 %v1278, %v1387
        %v1631 = vadd.f32 %v1279, %v1387
        %v1632 = vadd.f32 %v1280, %v1387
        %v1633 = vadd.f32 %v1281, %v1387
        %v1634 = vadd.f32 %v1282, %v1392
        %v1635 = vadd.f32 %v1283, %v1392
        %v1636 = vadd.f32 %v1284, %v1392
        %v1637 = vadd.f32 %v1285, %v1392
        %v1638 = vadd.f32 %v1286, %v1392
        %v1639 = vadd.f32 %v1287, %v1392
        %v1640 = vadd.f32 %v1288, %v1392
        %v1641 = vadd.f32 %v1289, %v1392
        %v1642 = vadd.f32 %v1290, %v1392
        %v1643 = vadd.f32 %v1291, %v1392
        %v1644 = vadd.f32 %v1292, %v1392
        %v1645 = vadd.f32 %v1293, %v1392
        %v1646 = vadd.f32 %v1294, %v1392
        %v1647 = vadd.f32 %v1295, %v1392
        %v1648 = vadd.f32 %v1296, %v1392
        %v1649 = vadd.f32 %v1297, %v1392
        %vm1650 = vcmp.gt.f32.partialorder %v1394, 0.0
        %vm1651 = vcmp.gt.f32.partialorder %v1395, 0.0
        %vm1652 = vcmp.gt.f32.partialorder %v1396, 0.0
        %vm1653 = vcmp.gt.f32.partialorder %v1397, 0.0
        %vm1654 = vcmp.gt.f32.partialorder %v1398, 0.0
        %vm1655 = vcmp.gt.f32.partialorder %v1399, 0.0
        %vm1656 = vcmp.gt.f32.partialorder %v1400, 0.0
        %vm1657 = vcmp.gt.f32.partialorder %v1401, 0.0
        %vm1658 = vcmp.gt.f32.partialorder %v1402, 0.0
        %vm1659 = vcmp.gt.f32.partialorder %v1403, 0.0
        %vm1660 = vcmp.gt.f32.partialorder %v1404, 0.0
        %vm1661 = vcmp.gt.f32.partialorder %v1405, 0.0
        %vm1662 = vcmp.gt.f32.partialorder %v1406, 0.0
        %vm1663 = vcmp.gt.f32.partialorder %v1407, 0.0
        %vm1664 = vcmp.gt.f32.partialorder %v1408, 0.0
        %vm1665 = vcmp.gt.f32.partialorder %v1409, 0.0
        %vm1666 = vcmp.gt.f32.partialorder %v1410, 0.0
        %vm1667 = vcmp.gt.f32.partialorder %v1411, 0.0
        %vm1668 = vcmp.gt.f32.partialorder %v1412, 0.0
        %vm1669 = vcmp.gt.f32.partialorder %v1413, 0.0
        %vm1670 = vcmp.gt.f32.partialorder %v1414, 0.0
        %vm1671 = vcmp.gt.f32.partialorder %v1415, 0.0
        %vm1672 = vcmp.gt.f32.partialorder %v1416, 0.0
        %vm1673 = vcmp.gt.f32.partialorder %v1417, 0.0
        %vm1674 = vcmp.gt.f32.partialorder %v1418, 0.0
        %vm1675 = vcmp.gt.f32.partialorder %v1419, 0.0
        %vm1676 = vcmp.gt.f32.partialorder %v1420, 0.0
        %vm1677 = vcmp.gt.f32.partialorder %v1421, 0.0
        %vm1678 = vcmp.gt.f32.partialorder %v1422, 0.0
        %vm1679 = vcmp.gt.f32.partialorder %v1423, 0.0
        %vm1680 = vcmp.gt.f32.partialorder %v1424, 0.0
        %vm1681 = vcmp.gt.f32.partialorder %v1425, 0.0
        %vm1682 = vcmp.gt.f32.partialorder %v1426, 0.0
        %vm1683 = vcmp.gt.f32.partialorder %v1427, 0.0
        %vm1684 = vcmp.gt.f32.partialorder %v1428, 0.0
        %vm1685 = vcmp.gt.f32.partialorder %v1429, 0.0
        %vm1686 = vcmp.gt.f32.partialorder %v1430, 0.0
        %vm1687 = vcmp.gt.f32.partialorder %v1431, 0.0
        %vm1688 = vcmp.gt.f32.partialorder %v1432, 0.0
        %vm1689 = vcmp.gt.f32.partialorder %v1433, 0.0
        %vm1690 = vcmp.gt.f32.partialorder %v1434, 0.0
        %vm1691 = vcmp.gt.f32.partialorder %v1435, 0.0
        %vm1692 = vcmp.gt.f32.partialorder %v1436, 0.0
        %vm1693 = vcmp.gt.f32.partialorder %v1437, 0.0
        %vm1694 = vcmp.gt.f32.partialorder %v1438, 0.0
        %vm1695 = vcmp.gt.f32.partialorder %v1439, 0.0
        %vm1696 = vcmp.gt.f32.partialorder %v1440, 0.0
        %vm1697 = vcmp.gt.f32.partialorder %v1441, 0.0
        %vm1698 = vcmp.gt.f32.partialorder %v1442, 0.0
        %vm1699 = vcmp.gt.f32.partialorder %v1443, 0.0
        %vm1700 = vcmp.gt.f32.partialorder %v1444, 0.0
        %vm1701 = vcmp.gt.f32.partialorder %v1445, 0.0
        %vm1702 = vcmp.gt.f32.partialorder %v1446, 0.0
        %vm1703 = vcmp.gt.f32.partialorder %v1447, 0.0
        %vm1704 = vcmp.gt.f32.partialorder %v1448, 0.0
        %vm1705 = vcmp.gt.f32.partialorder %v1449, 0.0
        %vm1706 = vcmp.gt.f32.partialorder %v1450, 0.0
        %vm1707 = vcmp.gt.f32.partialorder %v1451, 0.0
        %vm1708 = vcmp.gt.f32.partialorder %v1452, 0.0
        %vm1709 = vcmp.gt.f32.partialorder %v1453, 0.0
        %vm1710 = vcmp.gt.f32.partialorder %v1454, 0.0
        %vm1711 = vcmp.gt.f32.partialorder %v1455, 0.0
        %vm1712 = vcmp.gt.f32.partialorder %v1456, 0.0
        %vm1713 = vcmp.gt.f32.partialorder %v1457, 0.0
        %vm1714 = vcmp.gt.f32.partialorder %v1458, 0.0
        %vm1715 = vcmp.gt.f32.partialorder %v1459, 0.0
        %vm1716 = vcmp.gt.f32.partialorder %v1460, 0.0
        %vm1717 = vcmp.gt.f32.partialorder %v1461, 0.0
        %vm1718 = vcmp.gt.f32.partialorder %v1462, 0.0
        %vm1719 = vcmp.gt.f32.partialorder %v1463, 0.0
        %vm1720 = vcmp.gt.f32.partialorder %v1464, 0.0
        %vm1721 = vcmp.gt.f32.partialorder %v1465, 0.0
        %vm1722 = vcmp.gt.f32.partialorder %v1466, 0.0
        %vm1723 = vcmp.gt.f32.partialorder %v1467, 0.0
        %vm1724 = vcmp.gt.f32.partialorder %v1468, 0.0
        %vm1725 = vcmp.gt.f32.partialorder %v1469, 0.0
        %vm1726 = vcmp.gt.f32.partialorder %v1470, 0.0
        %vm1727 = vcmp.gt.f32.partialorder %v1471, 0.0
        %vm1728 = vcmp.gt.f32.partialorder %v1472, 0.0
        %vm1729 = vcmp.gt.f32.partialorder %v1473, 0.0
        %vm1730 = vcmp.gt.f32.partialorder %v1474, 0.0
        %vm1731 = vcmp.gt.f32.partialorder %v1475, 0.0
        %vm1732 = vcmp.gt.f32.partialorder %v1476, 0.0
        %vm1733 = vcmp.gt.f32.partialorder %v1477, 0.0
        %vm1734 = vcmp.gt.f32.partialorder %v1478, 0.0
        %vm1735 = vcmp.gt.f32.partialorder %v1479, 0.0
        %vm1736 = vcmp.gt.f32.partialorder %v1480, 0.0
        %vm1737 = vcmp.gt.f32.partialorder %v1481, 0.0
        %vm1738 = vcmp.gt.f32.partialorder %v1482, 0.0
        %vm1739 = vcmp.gt.f32.partialorder %v1483, 0.0
        %vm1740 = vcmp.gt.f32.partialorder %v1484, 0.0
        %vm1741 = vcmp.gt.f32.partialorder %v1485, 0.0
        %vm1742 = vcmp.gt.f32.partialorder %v1486, 0.0
        %vm1743 = vcmp.gt.f32.partialorder %v1487, 0.0
        %vm1744 = vcmp.gt.f32.partialorder %v1488, 0.0
        %vm1745 = vcmp.gt.f32.partialorder %v1489, 0.0
        %vm1746 = vcmp.gt.f32.partialorder %v1490, 0.0
        %vm1747 = vcmp.gt.f32.partialorder %v1491, 0.0
        %vm1748 = vcmp.gt.f32.partialorder %v1492, 0.0
        %vm1749 = vcmp.gt.f32.partialorder %v1493, 0.0
        %vm1750 = vcmp.gt.f32.partialorder %v1494, 0.0
        %vm1751 = vcmp.gt.f32.partialorder %v1495, 0.0
        %vm1752 = vcmp.gt.f32.partialorder %v1496, 0.0
        %vm1753 = vcmp.gt.f32.partialorder %v1497, 0.0
        %vm1754 = vcmp.gt.f32.partialorder %v1498, 0.0
        %vm1755 = vcmp.gt.f32.partialorder %v1499, 0.0
        %vm1756 = vcmp.gt.f32.partialorder %v1500, 0.0
        %vm1757 = vcmp.gt.f32.partialorder %v1501, 0.0
        %vm1758 = vcmp.gt.f32.partialorder %v1502, 0.0
        %vm1759 = vcmp.gt.f32.partialorder %v1503, 0.0
        %vm1760 = vcmp.gt.f32.partialorder %v1504, 0.0
        %vm1761 = vcmp.gt.f32.partialorder %v1505, 0.0
        %vm1762 = vcmp.gt.f32.partialorder %v1506, 0.0
        %vm1763 = vcmp.gt.f32.partialorder %v1507, 0.0
        %vm1764 = vcmp.gt.f32.partialorder %v1508, 0.0
        %vm1765 = vcmp.gt.f32.partialorder %v1509, 0.0
        %vm1766 = vcmp.gt.f32.partialorder %v1510, 0.0
        %vm1767 = vcmp.gt.f32.partialorder %v1511, 0.0
        %vm1768 = vcmp.gt.f32.partialorder %v1512, 0.0
        %vm1769 = vcmp.gt.f32.partialorder %v1513, 0.0
        %vm1770 = vcmp.gt.f32.partialorder %v1514, 0.0
        %vm1771 = vcmp.gt.f32.partialorder %v1515, 0.0
        %vm1772 = vcmp.gt.f32.partialorder %v1516, 0.0
        %vm1773 = vcmp.gt.f32.partialorder %v1517, 0.0
        %vm1774 = vcmp.gt.f32.partialorder %v1518, 0.0
        %vm1775 = vcmp.gt.f32.partialorder %v1519, 0.0
        %vm1776 = vcmp.gt.f32.partialorder %v1520, 0.0
        %vm1777 = vcmp.gt.f32.partialorder %v1521, 0.0
        %vm1778 = vcmp.gt.f32.partialorder %v1522, 0.0
        %vm1779 = vcmp.gt.f32.partialorder %v1523, 0.0
        %vm1780 = vcmp.gt.f32.partialorder %v1524, 0.0
        %vm1781 = vcmp.gt.f32.partialorder %v1525, 0.0
        %vm1782 = vcmp.gt.f32.partialorder %v1526, 0.0
        %vm1783 = vcmp.gt.f32.partialorder %v1527, 0.0
        %vm1784 = vcmp.gt.f32.partialorder %v1528, 0.0
        %vm1785 = vcmp.gt.f32.partialorder %v1529, 0.0
        %vm1786 = vcmp.gt.f32.partialorder %v1530, 0.0
        %vm1787 = vcmp.gt.f32.partialorder %v1531, 0.0
        %vm1788 = vcmp.gt.f32.partialorder %v1532, 0.0
        %vm1789 = vcmp.gt.f32.partialorder %v1533, 0.0
        %vm1790 = vcmp.gt.f32.partialorder %v1534, 0.0
        %vm1791 = vcmp.gt.f32.partialorder %v1535, 0.0
        %vm1792 = vcmp.gt.f32.partialorder %v1536, 0.0
        %vm1793 = vcmp.gt.f32.partialorder %v1537, 0.0
        %vm1794 = vcmp.gt.f32.partialorder %v1538, 0.0
        %vm1795 = vcmp.gt.f32.partialorder %v1539, 0.0
        %vm1796 = vcmp.gt.f32.partialorder %v1540, 0.0
        %vm1797 = vcmp.gt.f32.partialorder %v1541, 0.0
        %vm1798 = vcmp.gt.f32.partialorder %v1542, 0.0
        %vm1799 = vcmp.gt.f32.partialorder %v1543, 0.0
        %vm1800 = vcmp.gt.f32.partialorder %v1544, 0.0
        %vm1801 = vcmp.gt.f32.partialorder %v1545, 0.0
        %vm1802 = vcmp.gt.f32.partialorder %v1546, 0.0
        %vm1803 = vcmp.gt.f32.partialorder %v1547, 0.0
        %vm1804 = vcmp.gt.f32.partialorder %v1548, 0.0
        %vm1805 = vcmp.gt.f32.partialorder %v1549, 0.0
        %vm1806 = vcmp.gt.f32.partialorder %v1550, 0.0
        %vm1807 = vcmp.gt.f32.partialorder %v1551, 0.0
        %vm1808 = vcmp.gt.f32.partialorder %v1552, 0.0
        %vm1809 = vcmp.gt.f32.partialorder %v1553, 0.0
        %vm1810 = vcmp.gt.f32.partialorder %v1554, 0.0
        %vm1811 = vcmp.gt.f32.partialorder %v1555, 0.0
        %vm1812 = vcmp.gt.f32.partialorder %v1556, 0.0
        %vm1813 = vcmp.gt.f32.partialorder %v1557, 0.0
        %vm1814 = vcmp.gt.f32.partialorder %v1558, 0.0
        %vm1815 = vcmp.gt.f32.partialorder %v1559, 0.0
        %vm1816 = vcmp.gt.f32.partialorder %v1560, 0.0
        %vm1817 = vcmp.gt.f32.partialorder %v1561, 0.0
        %vm1818 = vcmp.gt.f32.partialorder %v1562, 0.0
        %vm1819 = vcmp.gt.f32.partialorder %v1563, 0.0
        %vm1820 = vcmp.gt.f32.partialorder %v1564, 0.0
        %vm1821 = vcmp.gt.f32.partialorder %v1565, 0.0
        %vm1822 = vcmp.gt.f32.partialorder %v1566, 0.0
        %vm1823 = vcmp.gt.f32.partialorder %v1567, 0.0
        %vm1824 = vcmp.gt.f32.partialorder %v1568, 0.0
        %vm1825 = vcmp.gt.f32.partialorder %v1569, 0.0
        %vm1826 = vcmp.gt.f32.partialorder %v1570, 0.0
        %vm1827 = vcmp.gt.f32.partialorder %v1571, 0.0
        %vm1828 = vcmp.gt.f32.partialorder %v1572, 0.0
        %vm1829 = vcmp.gt.f32.partialorder %v1573, 0.0
        %vm1830 = vcmp.gt.f32.partialorder %v1574, 0.0
        %vm1831 = vcmp.gt.f32.partialorder %v1575, 0.0
        %vm1832 = vcmp.gt.f32.partialorder %v1576, 0.0
        %vm1833 = vcmp.gt.f32.partialorder %v1577, 0.0
        %vm1834 = vcmp.gt.f32.partialorder %v1578, 0.0
        %vm1835 = vcmp.gt.f32.partialorder %v1579, 0.0
        %vm1836 = vcmp.gt.f32.partialorder %v1580, 0.0
        %vm1837 = vcmp.gt.f32.partialorder %v1581, 0.0
        %vm1838 = vcmp.gt.f32.partialorder %v1582, 0.0
        %vm1839 = vcmp.gt.f32.partialorder %v1583, 0.0
        %vm1840 = vcmp.gt.f32.partialorder %v1584, 0.0
        %vm1841 = vcmp.gt.f32.partialorder %v1585, 0.0
        %vm1842 = vcmp.gt.f32.partialorder %v1586, 0.0
        %vm1843 = vcmp.gt.f32.partialorder %v1587, 0.0
        %vm1844 = vcmp.gt.f32.partialorder %v1588, 0.0
        %vm1845 = vcmp.gt.f32.partialorder %v1589, 0.0
        %vm1846 = vcmp.gt.f32.partialorder %v1590, 0.0
        %vm1847 = vcmp.gt.f32.partialorder %v1591, 0.0
        %vm1848 = vcmp.gt.f32.partialorder %v1592, 0.0
        %vm1849 = vcmp.gt.f32.partialorder %v1593, 0.0
        %vm1850 = vcmp.gt.f32.partialorder %v1594, 0.0
        %vm1851 = vcmp.gt.f32.partialorder %v1595, 0.0
        %vm1852 = vcmp.gt.f32.partialorder %v1596, 0.0
        %vm1853 = vcmp.gt.f32.partialorder %v1597, 0.0
        %vm1854 = vcmp.gt.f32.partialorder %v1598, 0.0
        %vm1855 = vcmp.gt.f32.partialorder %v1599, 0.0
        %vm1856 = vcmp.gt.f32.partialorder %v1600, 0.0
        %vm1857 = vcmp.gt.f32.partialorder %v1601, 0.0
        %vm1858 = vcmp.gt.f32.partialorder %v1602, 0.0
        %vm1859 = vcmp.gt.f32.partialorder %v1603, 0.0
        %vm1860 = vcmp.gt.f32.partialorder %v1604, 0.0
        %vm1861 = vcmp.gt.f32.partialorder %v1605, 0.0
        %vm1862 = vcmp.gt.f32.partialorder %v1606, 0.0
        %vm1863 = vcmp.gt.f32.partialorder %v1607, 0.0
        %vm1864 = vcmp.gt.f32.partialorder %v1608, 0.0
        %vm1865 = vcmp.gt.f32.partialorder %v1609, 0.0
        %vm1866 = vcmp.gt.f32.partialorder %v1610, 0.0
        %vm1867 = vcmp.gt.f32.partialorder %v1611, 0.0
        %vm1868 = vcmp.gt.f32.partialorder %v1612, 0.0
        %vm1869 = vcmp.gt.f32.partialorder %v1613, 0.0
        %vm1870 = vcmp.gt.f32.partialorder %v1614, 0.0
        %vm1871 = vcmp.gt.f32.partialorder %v1615, 0.0
        %vm1872 = vcmp.gt.f32.partialorder %v1616, 0.0
        %vm1873 = vcmp.gt.f32.partialorder %v1617, 0.0
        %vm1874 = vcmp.gt.f32.partialorder %v1618, 0.0
        %vm1875 = vcmp.gt.f32.partialorder %v1619, 0.0
        %vm1876 = vcmp.gt.f32.partialorder %v1620, 0.0
        %vm1877 = vcmp.gt.f32.partialorder %v1621, 0.0
        %vm1878 = vcmp.gt.f32.partialorder %v1622, 0.0
        %vm1879 = vcmp.gt.f32.partialorder %v1623, 0.0
        %vm1880 = vcmp.gt.f32.partialorder %v1624, 0.0
        %vm1881 = vcmp.gt.f32.partialorder %v1625, 0.0
        %vm1882 = vcmp.gt.f32.partialorder %v1626, 0.0
        %vm1883 = vcmp.gt.f32.partialorder %v1627, 0.0
        %vm1884 = vcmp.gt.f32.partialorder %v1628, 0.0
        %vm1885 = vcmp.gt.f32.partialorder %v1629, 0.0
        %vm1886 = vcmp.gt.f32.partialorder %v1630, 0.0
        %vm1887 = vcmp.gt.f32.partialorder %v1631, 0.0
        %vm1888 = vcmp.gt.f32.partialorder %v1632, 0.0
        %vm1889 = vcmp.gt.f32.partialorder %v1633, 0.0
        %vm1890 = vcmp.gt.f32.partialorder %v1634, 0.0
        %vm1891 = vcmp.gt.f32.partialorder %v1635, 0.0
        %vm1892 = vcmp.gt.f32.partialorder %v1636, 0.0
        %vm1893 = vcmp.gt.f32.partialorder %v1637, 0.0
        %vm1894 = vcmp.gt.f32.partialorder %v1638, 0.0
        %vm1895 = vcmp.gt.f32.partialorder %v1639, 0.0
        %vm1896 = vcmp.gt.f32.partialorder %v1640, 0.0
        %vm1897 = vcmp.gt.f32.partialorder %v1641, 0.0
        %vm1898 = vcmp.gt.f32.partialorder %v1642, 0.0
        %vm1899 = vcmp.gt.f32.partialorder %v1643, 0.0
        %vm1900 = vcmp.gt.f32.partialorder %v1644, 0.0
        %vm1901 = vcmp.gt.f32.partialorder %v1645, 0.0
        %vm1902 = vcmp.gt.f32.partialorder %v1646, 0.0
        %vm1903 = vcmp.gt.f32.partialorder %v1647, 0.0
        %vm1904 = vcmp.gt.f32.partialorder %v1648, 0.0
        %vm1905 = vcmp.gt.f32.partialorder %v1649, 0.0
        %v1906 = vmul.f32 %v1394, 0.2
        %v1907 = vmul.f32 %v1395, 0.2
        %v1908 = vmul.f32 %v1396, 0.2
        %v1909 = vmul.f32 %v1397, 0.2
        %v1910 = vmul.f32 %v1398, 0.2
        %v1911 = vmul.f32 %v1399, 0.2
        %v1912 = vmul.f32 %v1400, 0.2
        %v1913 = vmul.f32 %v1401, 0.2
        %v1914 = vmul.f32 %v1402, 0.2
        %v1915 = vmul.f32 %v1403, 0.2
        %v1916 = vmul.f32 %v1404, 0.2
        %v1917 = vmul.f32 %v1405, 0.2
        %v1918 = vmul.f32 %v1406, 0.2
        %v1919 = vmul.f32 %v1407, 0.2
        %v1920 = vmul.f32 %v1408, 0.2
        %v1921 = vmul.f32 %v1409, 0.2
        %v1922 = vmul.f32 %v1410, 0.2
        %v1923 = vmul.f32 %v1411, 0.2
        %v1924 = vmul.f32 %v1412, 0.2
        %v1925 = vmul.f32 %v1413, 0.2
        %v1926 = vmul.f32 %v1414, 0.2
        %v1927 = vmul.f32 %v1415, 0.2
        %v1928 = vmul.f32 %v1416, 0.2
        %v1929 = vmul.f32 %v1417, 0.2
        %v1930 = vmul.f32 %v1418, 0.2
        %v1931 = vmul.f32 %v1419, 0.2
        %v1932 = vmul.f32 %v1420, 0.2
        %v1933 = vmul.f32 %v1421, 0.2
        %v1934 = vmul.f32 %v1422, 0.2
        %v1935 = vmul.f32 %v1423, 0.2
        %v1936 = vmul.f32 %v1424, 0.2
        %v1937 = vmul.f32 %v1425, 0.2
        %v1938 = vmul.f32 %v1426, 0.2
        %v1939 = vmul.f32 %v1427, 0.2
        %v1940 = vmul.f32 %v1428, 0.2
        %v1941 = vmul.f32 %v1429, 0.2
        %v1942 = vmul.f32 %v1430, 0.2
        %v1943 = vmul.f32 %v1431, 0.2
        %v1944 = vmul.f32 %v1432, 0.2
        %v1945 = vmul.f32 %v1433, 0.2
        %v1946 = vmul.f32 %v1434, 0.2
        %v1947 = vmul.f32 %v1435, 0.2
        %v1948 = vmul.f32 %v1436, 0.2
        %v1949 = vmul.f32 %v1437, 0.2
        %v1950 = vmul.f32 %v1438, 0.2
        %v1951 = vmul.f32 %v1439, 0.2
        %v1952 = vmul.f32 %v1440, 0.2
        %v1953 = vmul.f32 %v1441, 0.2
        %v1954 = vmul.f32 %v1442, 0.2
        %v1955 = vmul.f32 %v1443, 0.2
        %v1956 = vmul.f32 %v1444, 0.2
        %v1957 = vmul.f32 %v1445, 0.2
        %v1958 = vmul.f32 %v1446, 0.2
        %v1959 = vmul.f32 %v1447, 0.2
        %v1960 = vmul.f32 %v1448, 0.2
        %v1961 = vmul.f32 %v1449, 0.2
        %v1962 = vmul.f32 %v1450, 0.2
        %v1963 = vmul.f32 %v1451, 0.2
        %v1964 = vmul.f32 %v1452, 0.2
        %v1965 = vmul.f32 %v1453, 0.2
        %v1966 = vmul.f32 %v1454, 0.2
        %v1967 = vmul.f32 %v1455, 0.2
        %v1968 = vmul.f32 %v1456, 0.2
        %v1969 = vmul.f32 %v1457, 0.2
        %v1970 = vmul.f32 %v1458, 0.2
        %v1971 = vmul.f32 %v1459, 0.2
        %v1972 = vmul.f32 %v1460, 0.2
        %v1973 = vmul.f32 %v1461, 0.2
        %v1974 = vmul.f32 %v1462, 0.2
        %v1975 = vmul.f32 %v1463, 0.2
        %v1976 = vmul.f32 %v1464, 0.2
        %v1977 = vmul.f32 %v1465, 0.2
        %v1978 = vmul.f32 %v1466, 0.2
        %v1979 = vmul.f32 %v1467, 0.2
        %v1980 = vmul.f32 %v1468, 0.2
        %v1981 = vmul.f32 %v1469, 0.2
        %v1982 = vmul.f32 %v1470, 0.2
        %v1983 = vmul.f32 %v1471, 0.2
        %v1984 = vmul.f32 %v1472, 0.2
        %v1985 = vmul.f32 %v1473, 0.2
        %v1986 = vmul.f32 %v1474, 0.2
        %v1987 = vmul.f32 %v1475, 0.2
        %v1988 = vmul.f32 %v1476, 0.2
        %v1989 = vmul.f32 %v1477, 0.2
        %v1990 = vmul.f32 %v1478, 0.2
        %v1991 = vmul.f32 %v1479, 0.2
        %v1992 = vmul.f32 %v1480, 0.2
        %v1993 = vmul.f32 %v1481, 0.2
        %v1994 = vmul.f32 %v1482, 0.2
        %v1995 = vmul.f32 %v1483, 0.2
        %v1996 = vmul.f32 %v1484, 0.2
        %v1997 = vmul.f32 %v1485, 0.2
        %v1998 = vmul.f32 %v1486, 0.2
        %v1999 = vmul.f32 %v1487, 0.2
        %v2000 = vmul.f32 %v1488, 0.2
        %v2001 = vmul.f32 %v1489, 0.2
        %v2002 = vmul.f32 %v1490, 0.2
        %v2003 = vmul.f32 %v1491, 0.2
        %v2004 = vmul.f32 %v1492, 0.2
        %v2005 = vmul.f32 %v1493, 0.2
        %v2006 = vmul.f32 %v1494, 0.2
        %v2007 = vmul.f32 %v1495, 0.2
        %v2008 = vmul.f32 %v1496, 0.2
        %v2009 = vmul.f32 %v1497, 0.2
        %v2010 = vmul.f32 %v1498, 0.2
        %v2011 = vmul.f32 %v1499, 0.2
        %v2012 = vmul.f32 %v1500, 0.2
        %v2013 = vmul.f32 %v1501, 0.2
        %v2014 = vmul.f32 %v1502, 0.2
        %v2015 = vmul.f32 %v1503, 0.2
        %v2016 = vmul.f32 %v1504, 0.2
        %v2017 = vmul.f32 %v1505, 0.2
        %v2018 = vmul.f32 %v1506, 0.2
        %v2019 = vmul.f32 %v1507, 0.2
        %v2020 = vmul.f32 %v1508, 0.2
        %v2021 = vmul.f32 %v1509, 0.2
        %v2022 = vmul.f32 %v1510, 0.2
        %v2023 = vmul.f32 %v1511, 0.2
        %v2024 = vmul.f32 %v1512, 0.2
        %v2025 = vmul.f32 %v1513, 0.2
        %v2026 = vmul.f32 %v1514, 0.2
        %v2027 = vmul.f32 %v1515, 0.2
        %v2028 = vmul.f32 %v1516, 0.2
        %v2029 = vmul.f32 %v1517, 0.2
        %v2030 = vmul.f32 %v1518, 0.2
        %v2031 = vmul.f32 %v1519, 0.2
        %v2032 = vmul.f32 %v1520, 0.2
        %v2033 = vmul.f32 %v1521, 0.2
        %v2034 = vmul.f32 %v1522, 0.2
        %v2035 = vmul.f32 %v1523, 0.2
        %v2036 = vmul.f32 %v1524, 0.2
        %v2037 = vmul.f32 %v1525, 0.2
        %v2038 = vmul.f32 %v1526, 0.2
        %v2039 = vmul.f32 %v1527, 0.2
        %v2040 = vmul.f32 %v1528, 0.2
        %v2041 = vmul.f32 %v1529, 0.2
        %v2042 = vmul.f32 %v1530, 0.2
        %v2043 = vmul.f32 %v1531, 0.2
        %v2044 = vmul.f32 %v1532, 0.2
        %v2045 = vmul.f32 %v1533, 0.2
        %v2046 = vmul.f32 %v1534, 0.2
        %v2047 = vmul.f32 %v1535, 0.2
        %v2048 = vmul.f32 %v1536, 0.2
        %v2049 = vmul.f32 %v1537, 0.2
        %v2050 = vmul.f32 %v1538, 0.2
        %v2051 = vmul.f32 %v1539, 0.2
        %v2052 = vmul.f32 %v1540, 0.2
        %v2053 = vmul.f32 %v1541, 0.2
        %v2054 = vmul.f32 %v1542, 0.2
        %v2055 = vmul.f32 %v1543, 0.2
        %v2056 = vmul.f32 %v1544, 0.2
        %v2057 = vmul.f32 %v1545, 0.2
        %v2058 = vmul.f32 %v1546, 0.2
        %v2059 = vmul.f32 %v1547, 0.2
        %v2060 = vmul.f32 %v1548, 0.2
        %v2061 = vmul.f32 %v1549, 0.2
        %v2062 = vmul.f32 %v1550, 0.2
        %v2063 = vmul.f32 %v1551, 0.2
        %v2064 = vmul.f32 %v1552, 0.2
        %v2065 = vmul.f32 %v1553, 0.2
        %v2066 = vmul.f32 %v1554, 0.2
        %v2067 = vmul.f32 %v1555, 0.2
        %v2068 = vmul.f32 %v1556, 0.2
        %v2069 = vmul.f32 %v1557, 0.2
        %v2070 = vmul.f32 %v1558, 0.2
        %v2071 = vmul.f32 %v1559, 0.2
        %v2072 = vmul.f32 %v1560, 0.2
        %v2073 = vmul.f32 %v1561, 0.2
        %v2074 = vmul.f32 %v1562, 0.2
        %v2075 = vmul.f32 %v1563, 0.2
        %v2076 = vmul.f32 %v1564, 0.2
        %v2077 = vmul.f32 %v1565, 0.2
        %v2078 = vmul.f32 %v1566, 0.2
        %v2079 = vmul.f32 %v1567, 0.2
        %v2080 = vmul.f32 %v1568, 0.2
        %v2081 = vmul.f32 %v1569, 0.2
        %v2082 = vmul.f32 %v1570, 0.2
        %v2083 = vmul.f32 %v1571, 0.2
        %v2084 = vmul.f32 %v1572, 0.2
        %v2085 = vmul.f32 %v1573, 0.2
        %v2086 = vmul.f32 %v1574, 0.2
        %v2087 = vmul.f32 %v1575, 0.2
        %v2088 = vmul.f32 %v1576, 0.2
        %v2089 = vmul.f32 %v1577, 0.2
        %v2090 = vmul.f32 %v1578, 0.2
        %v2091 = vmul.f32 %v1579, 0.2
        %v2092 = vmul.f32 %v1580, 0.2
        %v2093 = vmul.f32 %v1581, 0.2
        %v2094 = vmul.f32 %v1582, 0.2
        %v2095 = vmul.f32 %v1583, 0.2
        %v2096 = vmul.f32 %v1584, 0.2
        %v2097 = vmul.f32 %v1585, 0.2
        %v2098 = vmul.f32 %v1586, 0.2
        %v2099 = vmul.f32 %v1587, 0.2
        %v2100 = vmul.f32 %v1588, 0.2
        %v2101 = vmul.f32 %v1589, 0.2
        %v2102 = vmul.f32 %v1590, 0.2
        %v2103 = vmul.f32 %v1591, 0.2
        %v2104 = vmul.f32 %v1592, 0.2
        %v2105 = vmul.f32 %v1593, 0.2
        %v2106 = vmul.f32 %v1594, 0.2
        %v2107 = vmul.f32 %v1595, 0.2
        %v2108 = vmul.f32 %v1596, 0.2
        %v2109 = vmul.f32 %v1597, 0.2
        %v2110 = vmul.f32 %v1598, 0.2
        %v2111 = vmul.f32 %v1599, 0.2
        %v2112 = vmul.f32 %v1600, 0.2
        %v2113 = vmul.f32 %v1601, 0.2
        %v2114 = vmul.f32 %v1602, 0.2
        %v2115 = vmul.f32 %v1603, 0.2
        %v2116 = vmul.f32 %v1604, 0.2
        %v2117 = vmul.f32 %v1605, 0.2
        %v2118 = vmul.f32 %v1606, 0.2
        %v2119 = vmul.f32 %v1607, 0.2
        %v2120 = vmul.f32 %v1608, 0.2
        %v2121 = vmul.f32 %v1609, 0.2
        %v2122 = vmul.f32 %v1610, 0.2
        %v2123 = vmul.f32 %v1611, 0.2
        %v2124 = vmul.f32 %v1612, 0.2
        %v2125 = vmul.f32 %v1613, 0.2
        %v2126 = vmul.f32 %v1614, 0.2
        %v2127 = vmul.f32 %v1615, 0.2
        %v2128 = vmul.f32 %v1616, 0.2
        %v2129 = vmul.f32 %v1617, 0.2
        %v2130 = vmul.f32 %v1618, 0.2
        %v2131 = vmul.f32 %v1619, 0.2
        %v2132 = vmul.f32 %v1620, 0.2
        %v2133 = vmul.f32 %v1621, 0.2
        %v2134 = vmul.f32 %v1622, 0.2
        %v2135 = vmul.f32 %v1623, 0.2
        %v2136 = vmul.f32 %v1624, 0.2
        %v2137 = vmul.f32 %v1625, 0.2
        %v2138 = vmul.f32 %v1626, 0.2
        %v2139 = vmul.f32 %v1627, 0.2
        %v2140 = vmul.f32 %v1628, 0.2
        %v2141 = vmul.f32 %v1629, 0.2
        %v2142 = vmul.f32 %v1630, 0.2
        %v2143 = vmul.f32 %v1631, 0.2
        %v2144 = vmul.f32 %v1632, 0.2
        %v2145 = vmul.f32 %v1633, 0.2
        %v2146 = vmul.f32 %v1634, 0.2
        %v2147 = vmul.f32 %v1635, 0.2
        %v2148 = vmul.f32 %v1636, 0.2
        %v2149 = vmul.f32 %v1637, 0.2
        %v2150 = vmul.f32 %v1638, 0.2
        %v2151 = vmul.f32 %v1639, 0.2
        %v2152 = vmul.f32 %v1640, 0.2
        %v2153 = vmul.f32 %v1641, 0.2
        %v2154 = vmul.f32 %v1642, 0.2
        %v2155 = vmul.f32 %v1643, 0.2
        %v2156 = vmul.f32 %v1644, 0.2
        %v2157 = vmul.f32 %v1645, 0.2
        %v2158 = vmul.f32 %v1646, 0.2
        %v2159 = vmul.f32 %v1647, 0.2
        %v2160 = vmul.f32 %v1648, 0.2
        %v2161 = vmul.f32 %v1649, 0.2
        %v2162 = vsel %vm1650, %v1394, %v1906
        %v2163 = vsel %vm1651, %v1395, %v1907
        %v2164 = vsel %vm1652, %v1396, %v1908
        %v2165 = vsel %vm1653, %v1397, %v1909
        %v2166 = vsel %vm1654, %v1398, %v1910
        %v2167 = vsel %vm1655, %v1399, %v1911
        %v2168 = vsel %vm1656, %v1400, %v1912
        %v2169 = vsel %vm1657, %v1401, %v1913
        %v2170 = vsel %vm1658, %v1402, %v1914
        %v2171 = vsel %vm1659, %v1403, %v1915
        %v2172 = vsel %vm1660, %v1404, %v1916
        %v2173 = vsel %vm1661, %v1405, %v1917
        %v2174 = vsel %vm1662, %v1406, %v1918
        %v2175 = vsel %vm1663, %v1407, %v1919
        %v2176 = vsel %vm1664, %v1408, %v1920
        %v2177 = vsel %vm1665, %v1409, %v1921
        %v2178 = vsel %vm1666, %v1410, %v1922
        %v2179 = vsel %vm1667, %v1411, %v1923
        %v2180 = vsel %vm1668, %v1412, %v1924
        %v2181 = vsel %vm1669, %v1413, %v1925
        %v2182 = vsel %vm1670, %v1414, %v1926
        %v2183 = vsel %vm1671, %v1415, %v1927
        %v2184 = vsel %vm1672, %v1416, %v1928
        %v2185 = vsel %vm1673, %v1417, %v1929
        %v2186 = vsel %vm1674, %v1418, %v1930
        %v2187 = vsel %vm1675, %v1419, %v1931
        %v2188 = vsel %vm1676, %v1420, %v1932
        %v2189 = vsel %vm1677, %v1421, %v1933
        %v2190 = vsel %vm1678, %v1422, %v1934
        %v2191 = vsel %vm1679, %v1423, %v1935
        %v2192 = vsel %vm1680, %v1424, %v1936
        %v2193 = vsel %vm1681, %v1425, %v1937
        %v2194 = vsel %vm1682, %v1426, %v1938
        %v2195 = vsel %vm1683, %v1427, %v1939
        %v2196 = vsel %vm1684, %v1428, %v1940
        %v2197 = vsel %vm1685, %v1429, %v1941
        %v2198 = vsel %vm1686, %v1430, %v1942
        %v2199 = vsel %vm1687, %v1431, %v1943
        %v2200 = vsel %vm1688, %v1432, %v1944
        %v2201 = vsel %vm1689, %v1433, %v1945
        %v2202 = vsel %vm1690, %v1434, %v1946
        %v2203 = vsel %vm1691, %v1435, %v1947
        %v2204 = vsel %vm1692, %v1436, %v1948
        %v2205 = vsel %vm1693, %v1437, %v1949
        %v2206 = vsel %vm1694, %v1438, %v1950
        %v2207 = vsel %vm1695, %v1439, %v1951
        %v2208 = vsel %vm1696, %v1440, %v1952
        %v2209 = vsel %vm1697, %v1441, %v1953
        %v2210 = vsel %vm1698, %v1442, %v1954
        %v2211 = vsel %vm1699, %v1443, %v1955
        %v2212 = vsel %vm1700, %v1444, %v1956
        %v2213 = vsel %vm1701, %v1445, %v1957
        %v2214 = vsel %vm1702, %v1446, %v1958
        %v2215 = vsel %vm1703, %v1447, %v1959
        %v2216 = vsel %vm1704, %v1448, %v1960
        %v2217 = vsel %vm1705, %v1449, %v1961
        %v2218 = vsel %vm1706, %v1450, %v1962
        %v2219 = vsel %vm1707, %v1451, %v1963
        %v2220 = vsel %vm1708, %v1452, %v1964
        %v2221 = vsel %vm1709, %v1453, %v1965
        %v2222 = vsel %vm1710, %v1454, %v1966
        %v2223 = vsel %vm1711, %v1455, %v1967
        %v2224 = vsel %vm1712, %v1456, %v1968
        %v2225 = vsel %vm1713, %v1457, %v1969
        %v2226 = vsel %vm1714, %v1458, %v1970
        %v2227 = vsel %vm1715, %v1459, %v1971
        %v2228 = vsel %vm1716, %v1460, %v1972
        %v2229 = vsel %vm1717, %v1461, %v1973
        %v2230 = vsel %vm1718, %v1462, %v1974
        %v2231 = vsel %vm1719, %v1463, %v1975
        %v2232 = vsel %vm1720, %v1464, %v1976
        %v2233 = vsel %vm1721, %v1465, %v1977
        %v2234 = vsel %vm1722, %v1466, %v1978
        %v2235 = vsel %vm1723, %v1467, %v1979
        %v2236 = vsel %vm1724, %v1468, %v1980
        %v2237 = vsel %vm1725, %v1469, %v1981
        %v2238 = vsel %vm1726, %v1470, %v1982
        %v2239 = vsel %vm1727, %v1471, %v1983
        %v2240 = vsel %vm1728, %v1472, %v1984
        %v2241 = vsel %vm1729, %v1473, %v1985
        %v2242 = vsel %vm1730, %v1474, %v1986
        %v2243 = vsel %vm1731, %v1475, %v1987
        %v2244 = vsel %vm1732, %v1476, %v1988
        %v2245 = vsel %vm1733, %v1477, %v1989
        %v2246 = vsel %vm1734, %v1478, %v1990
        %v2247 = vsel %vm1735, %v1479, %v1991
        %v2248 = vsel %vm1736, %v1480, %v1992
        %v2249 = vsel %vm1737, %v1481, %v1993
        %v2250 = vsel %vm1738, %v1482, %v1994
        %v2251 = vsel %vm1739, %v1483, %v1995
        %v2252 = vsel %vm1740, %v1484, %v1996
        %v2253 = vsel %vm1741, %v1485, %v1997
        %v2254 = vsel %vm1742, %v1486, %v1998
        %v2255 = vsel %vm1743, %v1487, %v1999
        %v2256 = vsel %vm1744, %v1488, %v2000
        %v2257 = vsel %vm1745, %v1489, %v2001
        %v2258 = vsel %vm1746, %v1490, %v2002
        %v2259 = vsel %vm1747, %v1491, %v2003
        %v2260 = vsel %vm1748, %v1492, %v2004
        %v2261 = vsel %vm1749, %v1493, %v2005
        %v2262 = vsel %vm1750, %v1494, %v2006
        %v2263 = vsel %vm1751, %v1495, %v2007
        %v2264 = vsel %vm1752, %v1496, %v2008
        %v2265 = vsel %vm1753, %v1497, %v2009
        %v2266 = vsel %vm1754, %v1498, %v2010
        %v2267 = vsel %vm1755, %v1499, %v2011
        %v2268 = vsel %vm1756, %v1500, %v2012
        %v2269 = vsel %vm1757, %v1501, %v2013
        %v2270 = vsel %vm1758, %v1502, %v2014
        %v2271 = vsel %vm1759, %v1503, %v2015
        %v2272 = vsel %vm1760, %v1504, %v2016
        %v2273 = vsel %vm1761, %v1505, %v2017
        %v2274 = vsel %vm1762, %v1506, %v2018
        %v2275 = vsel %vm1763, %v1507, %v2019
        %v2276 = vsel %vm1764, %v1508, %v2020
        %v2277 = vsel %vm1765, %v1509, %v2021
        %v2278 = vsel %vm1766, %v1510, %v2022
        %v2279 = vsel %vm1767, %v1511, %v2023
        %v2280 = vsel %vm1768, %v1512, %v2024
        %v2281 = vsel %vm1769, %v1513, %v2025
        %v2282 = vsel %vm1770, %v1514, %v2026
        %v2283 = vsel %vm1771, %v1515, %v2027
        %v2284 = vsel %vm1772, %v1516, %v2028
        %v2285 = vsel %vm1773, %v1517, %v2029
        %v2286 = vsel %vm1774, %v1518, %v2030
        %v2287 = vsel %vm1775, %v1519, %v2031
        %v2288 = vsel %vm1776, %v1520, %v2032
        %v2289 = vsel %vm1777, %v1521, %v2033
        %v2290 = vsel %vm1778, %v1522, %v2034
        %v2291 = vsel %vm1779, %v1523, %v2035
        %v2292 = vsel %vm1780, %v1524, %v2036
        %v2293 = vsel %vm1781, %v1525, %v2037
        %v2294 = vsel %vm1782, %v1526, %v2038
        %v2295 = vsel %vm1783, %v1527, %v2039
        %v2296 = vsel %vm1784, %v1528, %v2040
        %v2297 = vsel %vm1785, %v1529, %v2041
        %v2298 = vsel %vm1786, %v1530, %v2042
        %v2299 = vsel %vm1787, %v1531, %v2043
        %v2300 = vsel %vm1788, %v1532, %v2044
        %v2301 = vsel %vm1789, %v1533, %v2045
        %v2302 = vsel %vm1790, %v1534, %v2046
        %v2303 = vsel %vm1791, %v1535, %v2047
        %v2304 = vsel %vm1792, %v1536, %v2048
        %v2305 = vsel %vm1793, %v1537, %v2049
        %v2306 = vsel %vm1794, %v1538, %v2050
        %v2307 = vsel %vm1795, %v1539, %v2051
        %v2308 = vsel %vm1796, %v1540, %v2052
        %v2309 = vsel %vm1797, %v1541, %v2053
        %v2310 = vsel %vm1798, %v1542, %v2054
        %v2311 = vsel %vm1799, %v1543, %v2055
        %v2312 = vsel %vm1800, %v1544, %v2056
        %v2313 = vsel %vm1801, %v1545, %v2057
        %v2314 = vsel %vm1802, %v1546, %v2058
        %v2315 = vsel %vm1803, %v1547, %v2059
        %v2316 = vsel %vm1804, %v1548, %v2060
        %v2317 = vsel %vm1805, %v1549, %v2061
        %v2318 = vsel %vm1806, %v1550, %v2062
        %v2319 = vsel %vm1807, %v1551, %v2063
        %v2320 = vsel %vm1808, %v1552, %v2064
        %v2321 = vsel %vm1809, %v1553, %v2065
        %v2322 = vsel %vm1810, %v1554, %v2066
        %v2323 = vsel %vm1811, %v1555, %v2067
        %v2324 = vsel %vm1812, %v1556, %v2068
        %v2325 = vsel %vm1813, %v1557, %v2069
        %v2326 = vsel %vm1814, %v1558, %v2070
        %v2327 = vsel %vm1815, %v1559, %v2071
        %v2328 = vsel %vm1816, %v1560, %v2072
        %v2329 = vsel %vm1817, %v1561, %v2073
        %v2330 = vsel %vm1818, %v1562, %v2074
        %v2331 = vsel %vm1819, %v1563, %v2075
        %v2332 = vsel %vm1820, %v1564, %v2076
        %v2333 = vsel %vm1821, %v1565, %v2077
        %v2334 = vsel %vm1822, %v1566, %v2078
        %v2335 = vsel %vm1823, %v1567, %v2079
        %v2336 = vsel %vm1824, %v1568, %v2080
        %v2337 = vsel %vm1825, %v1569, %v2081
        %v2338 = vsel %vm1826, %v1570, %v2082
        %v2339 = vsel %vm1827, %v1571, %v2083
        %v2340 = vsel %vm1828, %v1572, %v2084
        %v2341 = vsel %vm1829, %v1573, %v2085
        %v2342 = vsel %vm1830, %v1574, %v2086
        %v2343 = vsel %vm1831, %v1575, %v2087
        %v2344 = vsel %vm1832, %v1576, %v2088
        %v2345 = vsel %vm1833, %v1577, %v2089
        %v2346 = vsel %vm1834, %v1578, %v2090
        %v2347 = vsel %vm1835, %v1579, %v2091
        %v2348 = vsel %vm1836, %v1580, %v2092
        %v2349 = vsel %vm1837, %v1581, %v2093
        %v2350 = vsel %vm1838, %v1582, %v2094
        %v2351 = vsel %vm1839, %v1583, %v2095
        %v2352 = vsel %vm1840, %v1584, %v2096
        %v2353 = vsel %vm1841, %v1585, %v2097
        %v2354 = vsel %vm1842, %v1586, %v2098
        %v2355 = vsel %vm1843, %v1587, %v2099
        %v2356 = vsel %vm1844, %v1588, %v2100
        %v2357 = vsel %vm1845, %v1589, %v2101
        %v2358 = vsel %vm1846, %v1590, %v2102
        %v2359 = vsel %vm1847, %v1591, %v2103
        %v2360 = vsel %vm1848, %v1592, %v2104
        %v2361 = vsel %vm1849, %v1593, %v2105
        %v2362 = vsel %vm1850, %v1594, %v2106
        %v2363 = vsel %vm1851, %v1595, %v2107
        %v2364 = vsel %vm1852, %v1596, %v2108
        %v2365 = vsel %vm1853, %v1597, %v2109
        %v2366 = vsel %vm1854, %v1598, %v2110
        %v2367 = vsel %vm1855, %v1599, %v2111
        %v2368 = vsel %vm1856, %v1600, %v2112
        %v2369 = vsel %vm1857, %v1601, %v2113
        %v2370 = vsel %vm1858, %v1602, %v2114
        %v2371 = vsel %vm1859, %v1603, %v2115
        %v2372 = vsel %vm1860, %v1604, %v2116
        %v2373 = vsel %vm1861, %v1605, %v2117
        %v2374 = vsel %vm1862, %v1606, %v2118
        %v2375 = vsel %vm1863, %v1607, %v2119
        %v2376 = vsel %vm1864, %v1608, %v2120
        %v2377 = vsel %vm1865, %v1609, %v2121
        %v2378 = vsel %vm1866, %v1610, %v2122
        %v2379 = vsel %vm1867, %v1611, %v2123
        %v2380 = vsel %vm1868, %v1612, %v2124
        %v2381 = vsel %vm1869, %v1613, %v2125
        %v2382 = vsel %vm1870, %v1614, %v2126
        %v2383 = vsel %vm1871, %v1615, %v2127
        %v2384 = vsel %vm1872, %v1616, %v2128
        %v2385 = vsel %vm1873, %v1617, %v2129
        %v2386 = vsel %vm1874, %v1618, %v2130
        %v2387 = vsel %vm1875, %v1619, %v2131
        %v2388 = vsel %vm1876, %v1620, %v2132
        %v2389 = vsel %vm1877, %v1621, %v2133
        %v2390 = vsel %vm1878, %v1622, %v2134
        %v2391 = vsel %vm1879, %v1623, %v2135
        %v2392 = vsel %vm1880, %v1624, %v2136
        %v2393 = vsel %vm1881, %v1625, %v2137
        %v2394 = vsel %vm1882, %v1626, %v2138
        %v2395 = vsel %vm1883, %v1627, %v2139
        %v2396 = vsel %vm1884, %v1628, %v2140
        %v2397 = vsel %vm1885, %v1629, %v2141
        %v2398 = vsel %vm1886, %v1630, %v2142
        %v2399 = vsel %vm1887, %v1631, %v2143
        %v2400 = vsel %vm1888, %v1632, %v2144
        %v2401 = vsel %vm1889, %v1633, %v2145
        %v2402 = vsel %vm1890, %v1634, %v2146
        %v2403 = vsel %vm1891, %v1635, %v2147
        %v2404 = vsel %vm1892, %v1636, %v2148
        %v2405 = vsel %vm1893, %v1637, %v2149
        %v2406 = vsel %vm1894, %v1638, %v2150
        %v2407 = vsel %vm1895, %v1639, %v2151
        %v2408 = vsel %vm1896, %v1640, %v2152
        %v2409 = vsel %vm1897, %v1641, %v2153
        %v2410 = vsel %vm1898, %v1642, %v2154
        %v2411 = vsel %vm1899, %v1643, %v2155
        %v2412 = vsel %vm1900, %v1644, %v2156
        %v2413 = vsel %vm1901, %v1645, %v2157
        %v2414 = vsel %vm1902, %v1646, %v2158
        %v2415 = vsel %vm1903, %v1647, %v2159
        %v2416 = vsel %vm1904, %v1648, %v2160
        %v2417 = vsel %vm1905, %v1649, %v2161
        %v2418 = vld [vmem:[%s3] sm:$0xff]
        %2419 = vmatprep.subr.mxu0 %v2163
        %2420 = vmatpush1.msra.mxu0 %v2162
        %2421 = vmatprep.subr.mxu0 %v2179
        %2422 = vmatpush1.msra.mxu0 %v2178
        %2423 = vmatprep.subr.mxu0 %v2195
        %2424 = vmatpush1.msra.mxu0 %v2194
        %2425 = vmatprep.subr.mxu0 %v2211
        %2426 = vmatpush1.msra.mxu0 %v2210
        %2427 = vmatprep.subr.mxu0 %v2227
        %2428 = vmatpush1.msra.mxu0 %v2226
        %2429 = vmatprep.subr.mxu0 %v2243
        %2430 = vmatpush1.msra.mxu0 %v2242
        %2431 = vmatprep.subr.mxu0 %v2259
        %2432 = vmatpush1.msra.mxu0 %v2258
        %2433 = vmatprep.subr.mxu0 %v2275
        %2434 = vmatpush1.msra.mxu0 %v2274
        %2435 = vmatprep.subr.mxu0 %v2291
        %2436 = vmatpush1.msra.mxu0 %v2290
        %2437 = vmatprep.subr.mxu0 %v2307
        %2438 = vmatpush1.msra.mxu0 %v2306
        %2439 = vmatprep.subr.mxu0 %v2323
        %2440 = vmatpush1.msra.mxu0 %v2322
        %2441 = vmatprep.subr.mxu0 %v2339
        %2442 = vmatpush1.msra.mxu0 %v2338
        %2443 = vmatprep.subr.mxu0 %v2355
        %2444 = vmatpush1.msra.mxu0 %v2354
        %2445 = vmatprep.subr.mxu0 %v2371
        %2446 = vmatpush1.msra.mxu0 %v2370
        %2447 = vmatprep.subr.mxu0 %v2387
        %2448 = vmatpush1.msra.mxu0 %v2386
        %2449 = vmatprep.subr.mxu0 %v2403
        %2450 = vmatpush1.msra.mxu0 %v2402
        %2451 = vmatprep.subr.mxu0 0.0
        %2452 = vmatpush1.msra.mxu0 0.0
        %2453 = vmatprep.subr.mxu0 0.0
        %2454 = vmatpush1.msra.mxu0 0.0
        %2455 = vmatprep.subr.mxu0 0.0
        %2456 = vmatpush1.msra.mxu0 0.0
        %2457 = vmatprep.subr.mxu0 0.0
        %2458 = vmatpush1.msra.mxu0 0.0
        %2459 = vmatprep.subr.mxu0 0.0
        %2460 = vmatpush1.msra.mxu0 0.0
        %2461 = vmatprep.subr.mxu0 0.0
        %2462 = vmatpush1.msra.mxu0 0.0
        %2463 = vmatprep.subr.mxu0 0.0
        %2464 = vmatpush1.msra.mxu0 0.0
        %2465 = vmatprep.subr.mxu0 0.0
        %2466 = vmatpush1.msra.mxu0 0.0
        %2467 = vmatprep.subr.mxu0 0.0
        %2468 = vmatpush1.msra.mxu0 0.0
        %2469 = vmatprep.subr.mxu0 0.0
        %2470 = vmatpush1.msra.mxu0 0.0
        %2471 = vmatprep.subr.mxu0 0.0
        %2472 = vmatpush1.msra.mxu0 0.0
        %2473 = vmatprep.subr.mxu0 0.0
        %2474 = vmatpush1.msra.mxu0 0.0
        %2475 = vmatprep.subr.mxu0 0.0
        %2476 = vmatpush1.msra.mxu0 0.0
        %2477 = vmatprep.subr.mxu0 0.0
        %2478 = vmatpush1.msra.mxu0 0.0
        %2479 = vmatprep.subr.mxu0 0.0
        %2480 = vmatpush1.msra.mxu0 0.0
        %2481 = vmatprep.subr.mxu0 0.0
        %2482 = vmatpush1.msra.mxu0 0.0
        %2483 = vmatprep.mubr.f32.mxu0 0.0
        %2484 = vmatmul.mubr.f32.gmra.mrb[0].mxu0 %v2418
        %v2485 = vpop.f32.mrb[0].mxu0
        %v2486 = vadd.f32 0.0, %v2485
        %v2487 = vpop.f32.mrb[0].mxu0
        %v2488 = vadd.f32 0.0, %v2487
        %2489 = vdwg.mxu0
        %2490 = vmatprep.subr.mxu0 %v2165
        %2491 = vmatpush1.msra.mxu0 %v2164
        %2492 = vmatprep.subr.mxu0 %v2181
        %2493 = vmatpush1.msra.mxu0 %v2180
        %2494 = vmatprep.subr.mxu0 %v2197
        %2495 = vmatpush1.msra.mxu0 %v2196
        %2496 = vmatprep.subr.mxu0 %v2213
        %2497 = vmatpush1.msra.mxu0 %v2212
        %2498 = vmatprep.subr.mxu0 %v2229
        %2499 = vmatpush1.msra.mxu0 %v2228
        %2500 = vmatprep.subr.mxu0 %v2245
        %2501 = vmatpush1.msra.mxu0 %v2244
        %2502 = vmatprep.subr.mxu0 %v2261
        %2503 = vmatpush1.msra.mxu0 %v2260
        %2504 = vmatprep.subr.mxu0 %v2277
        %2505 = vmatpush1.msra.mxu0 %v2276
        %2506 = vmatprep.subr.mxu0 %v2293
        %2507 = vmatpush1.msra.mxu0 %v2292
        %2508 = vmatprep.subr.mxu0 %v2309
        %2509 = vmatpush1.msra.mxu0 %v2308
        %2510 = vmatprep.subr.mxu0 %v2325
        %2511 = vmatpush1.msra.mxu0 %v2324
        %2512 = vmatprep.subr.mxu0 %v2341
        %2513 = vmatpush1.msra.mxu0 %v2340
        %2514 = vmatprep.subr.mxu0 %v2357
        %2515 = vmatpush1.msra.mxu0 %v2356
        %2516 = vmatprep.subr.mxu0 %v2373
        %2517 = vmatpush1.msra.mxu0 %v2372
        %2518 = vmatprep.subr.mxu0 %v2389
        %2519 = vmatpush1.msra.mxu0 %v2388
        %2520 = vmatprep.subr.mxu0 %v2405
        %2521 = vmatpush1.msra.mxu0 %v2404
        %2522 = vmatprep.subr.mxu0 0.0
        %2523 = vmatpush1.msra.mxu0 0.0
        %2524 = vmatprep.subr.mxu0 0.0
        %2525 = vmatpush1.msra.mxu0 0.0
        %2526 = vmatprep.subr.mxu0 0.0
        %2527 = vmatpush1.msra.mxu0 0.0
        %2528 = vmatprep.subr.mxu0 0.0
        %2529 = vmatpush1.msra.mxu0 0.0
        %2530 = vmatprep.subr.mxu0 0.0
        %2531 = vmatpush1.msra.mxu0 0.0
        %2532 = vmatprep.subr.mxu0 0.0
        %2533 = vmatpush1.msra.mxu0 0.0
        %2534 = vmatprep.subr.mxu0 0.0
        %2535 = vmatpush1.msra.mxu0 0.0
        %2536 = vmatprep.subr.mxu0 0.0
        %2537 = vmatpush1.msra.mxu0 0.0
        %2538 = vmatprep.subr.mxu0 0.0
        %2539 = vmatpush1.msra.mxu0 0.0
        %2540 = vmatprep.subr.mxu0 0.0
        %2541 = vmatpush1.msra.mxu0 0.0
        %2542 = vmatprep.subr.mxu0 0.0
        %2543 = vmatpush1.msra.mxu0 0.0
        %2544 = vmatprep.subr.mxu0 0.0
        %2545 = vmatpush1.msra.mxu0 0.0
        %2546 = vmatprep.subr.mxu0 0.0
        %2547 = vmatpush1.msra.mxu0 0.0
        %2548 = vmatprep.subr.mxu0 0.0
        %2549 = vmatpush1.msra.mxu0 0.0
        %2550 = vmatprep.subr.mxu0 0.0
        %2551 = vmatpush1.msra.mxu0 0.0
        %2552 = vmatprep.subr.mxu0 0.0
        %2553 = vmatpush1.msra.mxu0 0.0
        %2554 = vmatprep.mubr.f32.mxu0 0.0
        %2555 = vmatmul.mubr.f32.gmra.mrb[0].mxu0 %v2418
        %v2556 = vpop.f32.mrb[0].mxu0
        %v2557 = vadd.f32 0.0, %v2556
        %v2558 = vpop.f32.mrb[0].mxu0
        %v2559 = vadd.f32 0.0, %v2558
        %2560 = vdwg.mxu0
        %2561 = vmatprep.subr.mxu0 %v2167
        %2562 = vmatpush1.msra.mxu0 %v2166
        %2563 = vmatprep.subr.mxu0 %v2183
        %2564 = vmatpush1.msra.mxu0 %v2182
        %2565 = vmatprep.subr.mxu0 %v2199
        %2566 = vmatpush1.msra.mxu0 %v2198
        %2567 = vmatprep.subr.mxu0 %v2215
        %2568 = vmatpush1.msra.mxu0 %v2214
        %2569 = vmatprep.subr.mxu0 %v2231
        %2570 = vmatpush1.msra.mxu0 %v2230
        %2571 = vmatprep.subr.mxu0 %v2247
        %2572 = vmatpush1.msra.mxu0 %v2246
        %2573 = vmatprep.subr.mxu0 %v2263
        %2574 = vmatpush1.msra.mxu0 %v2262
        %2575 = vmatprep.subr.mxu0 %v2279
        %2576 = vmatpush1.msra.mxu0 %v2278
        %2577 = vmatprep.subr.mxu0 %v2295
        %2578 = vmatpush1.msra.mxu0 %v2294
        %2579 = vmatprep.subr.mxu0 %v2311
        %2580 = vmatpush1.msra.mxu0 %v2310
        %2581 = vmatprep.subr.mxu0 %v2327
        %2582 = vmatpush1.msra.mxu0 %v2326
        %2583 = vmatprep.subr.mxu0 %v2343
        %2584 = vmatpush1.msra.mxu0 %v2342
        %2585 = vmatprep.subr.mxu0 %v2359
        %2586 = vmatpush1.msra.mxu0 %v2358
        %2587 = vmatprep.subr.mxu0 %v2375
        %2588 = vmatpush1.msra.mxu0 %v2374
        %2589 = vmatprep.subr.mxu0 %v2391
        %2590 = vmatpush1.msra.mxu0 %v2390
        %2591 = vmatprep.subr.mxu0 %v2407
        %2592 = vmatpush1.msra.mxu0 %v2406
        %2593 = vmatprep.subr.mxu0 0.0
        %2594 = vmatpush1.msra.mxu0 0.0
        %2595 = vmatprep.subr.mxu0 0.0
        %2596 = vmatpush1.msra.mxu0 0.0
        %2597 = vmatprep.subr.mxu0 0.0
        %2598 = vmatpush1.msra.mxu0 0.0
        %2599 = vmatprep.subr.mxu0 0.0
        %2600 = vmatpush1.msra.mxu0 0.0
        %2601 = vmatprep.subr.mxu0 0.0
        %2602 = vmatpush1.msra.mxu0 0.0
        %2603 = vmatprep.subr.mxu0 0.0
        %2604 = vmatpush1.msra.mxu0 0.0
        %2605 = vmatprep.subr.mxu0 0.0
        %2606 = vmatpush1.msra.mxu0 0.0
        %2607 = vmatprep.subr.mxu0 0.0
        %2608 = vmatpush1.msra.mxu0 0.0
        %2609 = vmatprep.subr.mxu0 0.0
        %2610 = vmatpush1.msra.mxu0 0.0
        %2611 = vmatprep.subr.mxu0 0.0
        %2612 = vmatpush1.msra.mxu0 0.0
        %2613 = vmatprep.subr.mxu0 0.0
        %2614 = vmatpush1.msra.mxu0 0.0
        %2615 = vmatprep.subr.mxu0 0.0
        %2616 = vmatpush1.msra.mxu0 0.0
        %2617 = vmatprep.subr.mxu0 0.0
        %2618 = vmatpush1.msra.mxu0 0.0
        %2619 = vmatprep.subr.mxu0 0.0
        %2620 = vmatpush1.msra.mxu0 0.0
        %2621 = vmatprep.subr.mxu0 0.0
        %2622 = vmatpush1.msra.mxu0 0.0
        %2623 = vmatprep.subr.mxu0 0.0
        %2624 = vmatpush1.msra.mxu0 0.0
        %2625 = vmatprep.mubr.f32.mxu0 0.0
        %2626 = vmatmul.mubr.f32.gmra.mrb[0].mxu0 %v2418
        %v2627 = vpop.f32.mrb[0].mxu0
        %v2628 = vadd.f32 0.0, %v2627
        %v2629 = vpop.f32.mrb[0].mxu0
        %v2630 = vadd.f32 0.0, %v2629
        %2631 = vdwg.mxu0
        %2632 = vmatprep.subr.mxu0 %v2169
        %2633 = vmatpush1.msra.mxu0 %v2168
        %2634 = vmatprep.subr.mxu0 %v2185
        %2635 = vmatpush1.msra.mxu0 %v2184
        %2636 = vmatprep.subr.mxu0 %v2201
        %2637 = vmatpush1.msra.mxu0 %v2200
        %2638 = vmatprep.subr.mxu0 %v2217
        %2639 = vmatpush1.msra.mxu0 %v2216
        %2640 = vmatprep.subr.mxu0 %v2233
        %2641 = vmatpush1.msra.mxu0 %v2232
        %2642 = vmatprep.subr.mxu0 %v2249
        %2643 = vmatpush1.msra.mxu0 %v2248
        %2644 = vmatprep.subr.mxu0 %v2265
        %2645 = vmatpush1.msra.mxu0 %v2264
        %2646 = vmatprep.subr.mxu0 %v2281
        %2647 = vmatpush1.msra.mxu0 %v2280
        %2648 = vmatprep.subr.mxu0 %v2297
        %2649 = vmatpush1.msra.mxu0 %v2296
        %2650 = vmatprep.subr.mxu0 %v2313
        %2651 = vmatpush1.msra.mxu0 %v2312
        %2652 = vmatprep.subr.mxu0 %v2329
        %2653 = vmatpush1.msra.mxu0 %v2328
        %2654 = vmatprep.subr.mxu0 %v2345
        %2655 = vmatpush1.msra.mxu0 %v2344
        %2656 = vmatprep.subr.mxu0 %v2361
        %2657 = vmatpush1.msra.mxu0 %v2360
        %2658 = vmatprep.subr.mxu0 %v2377
        %2659 = vmatpush1.msra.mxu0 %v2376
        %2660 = vmatprep.subr.mxu0 %v2393
        %2661 = vmatpush1.msra.mxu0 %v2392
        %2662 = vmatprep.subr.mxu0 %v2409
        %2663 = vmatpush1.msra.mxu0 %v2408
        %2664 = vmatprep.subr.mxu0 0.0
        %2665 = vmatpush1.msra.mxu0 0.0
        %2666 = vmatprep.subr.mxu0 0.0
        %2667 = vmatpush1.msra.mxu0 0.0
        %2668 = vmatprep.subr.mxu0 0.0
        %2669 = vmatpush1.msra.mxu0 0.0
        %2670 = vmatprep.subr.mxu0 0.0
        %2671 = vmatpush1.msra.mxu0 0.0
        %2672 = vmatprep.subr.mxu0 0.0
        %2673 = vmatpush1.msra.mxu0 0.0
        %2674 = vmatprep.subr.mxu0 0.0
        %2675 = vmatpush1.msra.mxu0 0.0
        %2676 = vmatprep.subr.mxu0 0.0
        %2677 = vmatpush1.msra.mxu0 0.0
        %2678 = vmatprep.subr.mxu0 0.0
        %2679 = vmatpush1.msra.mxu0 0.0
        %2680 = vmatprep.subr.mxu0 0.0
        %2681 = vmatpush1.msra.mxu0 0.0
        %2682 = vmatprep.subr.mxu0 0.0
        %2683 = vmatpush1.msra.mxu0 0.0
        %2684 = vmatprep.subr.mxu0 0.0
        %2685 = vmatpush1.msra.mxu0 0.0
        %2686 = vmatprep.subr.mxu0 0.0
        %2687 = vmatpush1.msra.mxu0 0.0
        %2688 = vmatprep.subr.mxu0 0.0
        %2689 = vmatpush1.msra.mxu0 0.0
        %2690 = vmatprep.subr.mxu0 0.0
        %2691 = vmatpush1.msra.mxu0 0.0
        %2692 = vmatprep.subr.mxu0 0.0
        %2693 = vmatpush1.msra.mxu0 0.0
        %2694 = vmatprep.subr.mxu0 0.0
        %2695 = vmatpush1.msra.mxu0 0.0
        %2696 = vmatprep.mubr.f32.mxu0 0.0
        %2697 = vmatmul.mubr.f32.gmra.mrb[0].mxu0 %v2418
        %v2698 = vpop.f32.mrb[0].mxu0
        %v2699 = vadd.f32 0.0, %v2698
        %v2700 = vpop.f32.mrb[0].mxu0
        %v2701 = vadd.f32 0.0, %v2700
        %2702 = vdwg.mxu0
        %2703 = vmatprep.subr.mxu0 %v2171
        %2704 = vmatpush1.msra.mxu0 %v2170
        %2705 = vmatprep.subr.mxu0 %v2187
        %2706 = vmatpush1.msra.mxu0 %v2186
        %2707 = vmatprep.subr.mxu0 %v2203
        %2708 = vmatpush1.msra.mxu0 %v2202
        %2709 = vmatprep.subr.mxu0 %v2219
        %2710 = vmatpush1.msra.mxu0 %v2218
        %2711 = vmatprep.subr.mxu0 %v2235
        %2712 = vmatpush1.msra.mxu0 %v2234
        %2713 = vmatprep.subr.mxu0 %v2251
        %2714 = vmatpush1.msra.mxu0 %v2250
        %2715 = vmatprep.subr.mxu0 %v2267
        %2716 = vmatpush1.msra.mxu0 %v2266
        %2717 = vmatprep.subr.mxu0 %v2283
        %2718 = vmatpush1.msra.mxu0 %v2282
        %2719 = vmatprep.subr.mxu0 %v2299
        %2720 = vmatpush1.msra.mxu0 %v2298
        %2721 = vmatprep.subr.mxu0 %v2315
        %2722 = vmatpush1.msra.mxu0 %v2314
        %2723 = vmatprep.subr.mxu0 %v2331
        %2724 = vmatpush1.msra.mxu0 %v2330
        %2725 = vmatprep.subr.mxu0 %v2347
        %2726 = vmatpush1.msra.mxu0 %v2346
        %2727 = vmatprep.subr.mxu0 %v2363
        %2728 = vmatpush1.msra.mxu0 %v2362
        %2729 = vmatprep.subr.mxu0 %v2379
        %2730 = vmatpush1.msra.mxu0 %v2378
        %2731 = vmatprep.subr.mxu0 %v2395
        %2732 = vmatpush1.msra.mxu0 %v2394
        %2733 = vmatprep.subr.mxu0 %v2411
        %2734 = vmatpush1.msra.mxu0 %v2410
        %2735 = vmatprep.subr.mxu0 0.0
        %2736 = vmatpush1.msra.mxu0 0.0
        %2737 = vmatprep.subr.mxu0 0.0
        %2738 = vmatpush1.msra.mxu0 0.0
        %2739 = vmatprep.subr.mxu0 0.0
        %2740 = vmatpush1.msra.mxu0 0.0
        %2741 = vmatprep.subr.mxu0 0.0
        %2742 = vmatpush1.msra.mxu0 0.0
        %2743 = vmatprep.subr.mxu0 0.0
        %2744 = vmatpush1.msra.mxu0 0.0
        %2745 = vmatprep.subr.mxu0 0.0
        %2746 = vmatpush1.msra.mxu0 0.0
        %2747 = vmatprep.subr.mxu0 0.0
        %2748 = vmatpush1.msra.mxu0 0.0
        %2749 = vmatprep.subr.mxu0 0.0
        %2750 = vmatpush1.msra.mxu0 0.0
        %2751 = vmatprep.subr.mxu0 0.0
        %2752 = vmatpush1.msra.mxu0 0.0
        %2753 = vmatprep.subr.mxu0 0.0
        %2754 = vmatpush1.msra.mxu0 0.0
        %2755 = vmatprep.subr.mxu0 0.0
        %2756 = vmatpush1.msra.mxu0 0.0
        %2757 = vmatprep.subr.mxu0 0.0
        %2758 = vmatpush1.msra.mxu0 0.0
        %2759 = vmatprep.subr.mxu0 0.0
        %2760 = vmatpush1.msra.mxu0 0.0
        %2761 = vmatprep.subr.mxu0 0.0
        %2762 = vmatpush1.msra.mxu0 0.0
        %2763 = vmatprep.subr.mxu0 0.0
        %2764 = vmatpush1.msra.mxu0 0.0
        %2765 = vmatprep.subr.mxu0 0.0
        %2766 = vmatpush1.msra.mxu0 0.0
        %2767 = vmatprep.mubr.f32.mxu0 0.0
        %2768 = vmatmul.mubr.f32.gmra.mrb[0].mxu0 %v2418
        %v2769 = vpop.f32.mrb[0].mxu0
        %v2770 = vadd.f32 0.0, %v2769
        %v2771 = vpop.f32.mrb[0].mxu0
        %v2772 = vadd.f32 0.0, %v2771
        %2773 = vdwg.mxu0
        %2774 = vmatprep.subr.mxu0 %v2173
        %2775 = vmatpush1.msra.mxu0 %v2172
        %2776 = vmatprep.subr.mxu0 %v2189
        %2777 = vmatpush1.msra.mxu0 %v2188
        %2778 = vmatprep.subr.mxu0 %v2205
        %2779 = vmatpush1.msra.mxu0 %v2204
        %2780 = vmatprep.subr.mxu0 %v2221
        %2781 = vmatpush1.msra.mxu0 %v2220
        %2782 = vmatprep.subr.mxu0 %v2237
        %2783 = vmatpush1.msra.mxu0 %v2236
        %2784 = vmatprep.subr.mxu0 %v2253
        %2785 = vmatpush1.msra.mxu0 %v2252
        %2786 = vmatprep.subr.mxu0 %v2269
        %2787 = vmatpush1.msra.mxu0 %v2268
        %2788 = vmatprep.subr.mxu0 %v2285
        %2789 = vmatpush1.msra.mxu0 %v2284
        %2790 = vmatprep.subr.mxu0 %v2301
        %2791 = vmatpush1.msra.mxu0 %v2300
        %2792 = vmatprep.subr.mxu0 %v2317
        %2793 = vmatpush1.msra.mxu0 %v2316
        %2794 = vmatprep.subr.mxu0 %v2333
        %2795 = vmatpush1.msra.mxu0 %v2332
        %2796 = vmatprep.subr.mxu0 %v2349
        %2797 = vmatpush1.msra.mxu0 %v2348
        %2798 = vmatprep.subr.mxu0 %v2365
        %2799 = vmatpush1.msra.mxu0 %v2364
        %2800 = vmatprep.subr.mxu0 %v2381
        %2801 = vmatpush1.msra.mxu0 %v2380
        %2802 = vmatprep.subr.mxu0 %v2397
        %2803 = vmatpush1.msra.mxu0 %v2396
        %2804 = vmatprep.subr.mxu0 %v2413
        %2805 = vmatpush1.msra.mxu0 %v2412
        %2806 = vmatprep.subr.mxu0 0.0
        %2807 = vmatpush1.msra.mxu0 0.0
        %2808 = vmatprep.subr.mxu0 0.0
        %2809 = vmatpush1.msra.mxu0 0.0
        %2810 = vmatprep.subr.mxu0 0.0
        %2811 = vmatpush1.msra.mxu0 0.0
        %2812 = vmatprep.subr.mxu0 0.0
        %2813 = vmatpush1.msra.mxu0 0.0
        %2814 = vmatprep.subr.mxu0 0.0
        %2815 = vmatpush1.msra.mxu0 0.0
        %2816 = vmatprep.subr.mxu0 0.0
        %2817 = vmatpush1.msra.mxu0 0.0
        %2818 = vmatprep.subr.mxu0 0.0
        %2819 = vmatpush1.msra.mxu0 0.0
        %2820 = vmatprep.subr.mxu0 0.0
        %2821 = vmatpush1.msra.mxu0 0.0
        %2822 = vmatprep.subr.mxu0 0.0
        %2823 = vmatpush1.msra.mxu0 0.0
        %2824 = vmatprep.subr.mxu0 0.0
        %2825 = vmatpush1.msra.mxu0 0.0
        %2826 = vmatprep.subr.mxu0 0.0
        %2827 = vmatpush1.msra.mxu0 0.0
        %2828 = vmatprep.subr.mxu0 0.0
        %2829 = vmatpush1.msra.mxu0 0.0
        %2830 = vmatprep.subr.mxu0 0.0
        %2831 = vmatpush1.msra.mxu0 0.0
        %2832 = vmatprep.subr.mxu0 0.0
        %2833 = vmatpush1.msra.mxu0 0.0
        %2834 = vmatprep.subr.mxu0 0.0
        %2835 = vmatpush1.msra.mxu0 0.0
        %2836 = vmatprep.subr.mxu0 0.0
        %2837 = vmatpush1.msra.mxu0 0.0
        %2838 = vmatprep.mubr.f32.mxu0 0.0
        %2839 = vmatmul.mubr.f32.gmra.mrb[0].mxu0 %v2418
        %v2840 = vpop.f32.mrb[0].mxu0
        %v2841 = vadd.f32 0.0, %v2840
        %v2842 = vpop.f32.mrb[0].mxu0
        %v2843 = vadd.f32 0.0, %v2842
        %2844 = vdwg.mxu0
        %2845 = vmatprep.subr.mxu0 %v2175
        %2846 = vmatpush1.msra.mxu0 %v2174
        %2847 = vmatprep.subr.mxu0 %v2191
        %2848 = vmatpush1.msra.mxu0 %v2190
        %2849 = vmatprep.subr.mxu0 %v2207
        %2850 = vmatpush1.msra.mxu0 %v2206
        %2851 = vmatprep.subr.mxu0 %v2223
        %2852 = vmatpush1.msra.mxu0 %v2222
        %2853 = vmatprep.subr.mxu0 %v2239
        %2854 = vmatpush1.msra.mxu0 %v2238
        %2855 = vmatprep.subr.mxu0 %v2255
        %2856 = vmatpush1.msra.mxu0 %v2254
        %2857 = vmatprep.subr.mxu0 %v2271
        %2858 = vmatpush1.msra.mxu0 %v2270
        %2859 = vmatprep.subr.mxu0 %v2287
        %2860 = vmatpush1.msra.mxu0 %v2286
        %2861 = vmatprep.subr.mxu0 %v2303
        %2862 = vmatpush1.msra.mxu0 %v2302
        %2863 = vmatprep.subr.mxu0 %v2319
        %2864 = vmatpush1.msra.mxu0 %v2318
        %2865 = vmatprep.subr.mxu0 %v2335
        %2866 = vmatpush1.msra.mxu0 %v2334
        %2867 = vmatprep.subr.mxu0 %v2351
        %2868 = vmatpush1.msra.mxu0 %v2350
        %2869 = vmatprep.subr.mxu0 %v2367
        %2870 = vmatpush1.msra.mxu0 %v2366
        %2871 = vmatprep.subr.mxu0 %v2383
        %2872 = vmatpush1.msra.mxu0 %v2382
        %2873 = vmatprep.subr.mxu0 %v2399
        %2874 = vmatpush1.msra.mxu0 %v2398
        %2875 = vmatprep.subr.mxu0 %v2415
        %2876 = vmatpush1.msra.mxu0 %v2414
        %2877 = vmatprep.subr.mxu0 0.0
        %2878 = vmatpush1.msra.mxu0 0.0
        %2879 = vmatprep.subr.mxu0 0.0
        %2880 = vmatpush1.msra.mxu0 0.0
        %2881 = vmatprep.subr.mxu0 0.0
        %2882 = vmatpush1.msra.mxu0 0.0
        %2883 = vmatprep.subr.mxu0 0.0
        %2884 = vmatpush1.msra.mxu0 0.0
        %2885 = vmatprep.subr.mxu0 0.0
        %2886 = vmatpush1.msra.mxu0 0.0
        %2887 = vmatprep.subr.mxu0 0.0
        %2888 = vmatpush1.msra.mxu0 0.0
        %2889 = vmatprep.subr.mxu0 0.0
        %2890 = vmatpush1.msra.mxu0 0.0
        %2891 = vmatprep.subr.mxu0 0.0
        %2892 = vmatpush1.msra.mxu0 0.0
        %2893 = vmatprep.subr.mxu0 0.0
        %2894 = vmatpush1.msra.mxu0 0.0
        %2895 = vmatprep.subr.mxu0 0.0
        %2896 = vmatpush1.msra.mxu0 0.0
        %2897 = vmatprep.subr.mxu0 0.0
        %2898 = vmatpush1.msra.mxu0 0.0
        %2899 = vmatprep.subr.mxu0 0.0
        %2900 = vmatpush1.msra.mxu0 0.0
        %2901 = vmatprep.subr.mxu0 0.0
        %2902 = vmatpush1.msra.mxu0 0.0
        %2903 = vmatprep.subr.mxu0 0.0
        %2904 = vmatpush1.msra.mxu0 0.0
        %2905 = vmatprep.subr.mxu0 0.0
        %2906 = vmatpush1.msra.mxu0 0.0
        %2907 = vmatprep.subr.mxu0 0.0
        %2908 = vmatpush1.msra.mxu0 0.0
        %2909 = vmatprep.mubr.f32.mxu0 0.0
        %2910 = vmatmul.mubr.f32.gmra.mrb[0].mxu0 %v2418
        %v2911 = vpop.f32.mrb[0].mxu0
        %v2912 = vadd.f32 0.0, %v2911
        %v2913 = vpop.f32.mrb[0].mxu0
        %v2914 = vadd.f32 0.0, %v2913
        %2915 = vdwg.mxu0
        %2916 = vmatprep.subr.mxu0 %v2177
        %2917 = vmatpush1.msra.mxu0 %v2176
        %2918 = vmatprep.subr.mxu0 %v2193
        %2919 = vmatpush1.msra.mxu0 %v2192
        %2920 = vmatprep.subr.mxu0 %v2209
        %2921 = vmatpush1.msra.mxu0 %v2208
        %2922 = vmatprep.subr.mxu0 %v2225
        %2923 = vmatpush1.msra.mxu0 %v2224
        %2924 = vmatprep.subr.mxu0 %v2241
        %2925 = vmatpush1.msra.mxu0 %v2240
        %2926 = vmatprep.subr.mxu0 %v2257
        %2927 = vmatpush1.msra.mxu0 %v2256
        %2928 = vmatprep.subr.mxu0 %v2273
        %2929 = vmatpush1.msra.mxu0 %v2272
        %2930 = vmatprep.subr.mxu0 %v2289
        %2931 = vmatpush1.msra.mxu0 %v2288
        %2932 = vmatprep.subr.mxu0 %v2305
        %2933 = vmatpush1.msra.mxu0 %v2304
        %2934 = vmatprep.subr.mxu0 %v2321
        %2935 = vmatpush1.msra.mxu0 %v2320
        %2936 = vmatprep.subr.mxu0 %v2337
        %2937 = vmatpush1.msra.mxu0 %v2336
        %2938 = vmatprep.subr.mxu0 %v2353
        %2939 = vmatpush1.msra.mxu0 %v2352
        %2940 = vmatprep.subr.mxu0 %v2369
        %2941 = vmatpush1.msra.mxu0 %v2368
        %2942 = vmatprep.subr.mxu0 %v2385
        %2943 = vmatpush1.msra.mxu0 %v2384
        %2944 = vmatprep.subr.mxu0 %v2401
        %2945 = vmatpush1.msra.mxu0 %v2400
        %2946 = vmatprep.subr.mxu0 %v2417
        %2947 = vmatpush1.msra.mxu0 %v2416
        %2948 = vmatprep.subr.mxu0 0.0
        %2949 = vmatpush1.msra.mxu0 0.0
        %2950 = vmatprep.subr.mxu0 0.0
        %2951 = vmatpush1.msra.mxu0 0.0
        %2952 = vmatprep.subr.mxu0 0.0
        %2953 = vmatpush1.msra.mxu0 0.0
        %2954 = vmatprep.subr.mxu0 0.0
        %2955 = vmatpush1.msra.mxu0 0.0
        %2956 = vmatprep.subr.mxu0 0.0
        %2957 = vmatpush1.msra.mxu0 0.0
        %2958 = vmatprep.subr.mxu0 0.0
        %2959 = vmatpush1.msra.mxu0 0.0
        %2960 = vmatprep.subr.mxu0 0.0
        %2961 = vmatpush1.msra.mxu0 0.0
        %2962 = vmatprep.subr.mxu0 0.0
        %2963 = vmatpush1.msra.mxu0 0.0
        %2964 = vmatprep.subr.mxu0 0.0
        %2965 = vmatpush1.msra.mxu0 0.0
        %2966 = vmatprep.subr.mxu0 0.0
        %2967 = vmatpush1.msra.mxu0 0.0
        %2968 = vmatprep.subr.mxu0 0.0
        %2969 = vmatpush1.msra.mxu0 0.0
        %2970 = vmatprep.subr.mxu0 0.0
        %2971 = vmatpush1.msra.mxu0 0.0
        %2972 = vmatprep.subr.mxu0 0.0
        %2973 = vmatpush1.msra.mxu0 0.0
        %2974 = vmatprep.subr.mxu0 0.0
        %2975 = vmatpush1.msra.mxu0 0.0
        %2976 = vmatprep.subr.mxu0 0.0
        %2977 = vmatpush1.msra.mxu0 0.0
        %2978 = vmatprep.subr.mxu0 0.0
        %2979 = vmatpush1.msra.mxu0 0.0
        %2980 = vmatprep.mubr.f32.mxu0 0.0
        %2981 = vmatmul.mubr.f32.gmra.mrb[0].mxu0 %v2418
        %v2982 = vpop.f32.mrb[0].mxu0
        %v2983 = vadd.f32 0.0, %v2982
        %v2984 = vpop.f32.mrb[0].mxu0
        %v2985 = vadd.f32 0.0, %v2984
        %2986 = vdwg.mxu0
        %2987 = vst [vmem:[%s191] sm:$0xff] %v2486
        %2988 = vst [vmem:[%s191 + $0x8] sm:$0xff] %v2488
        %2989 = vst [vmem:[%s191 + $0x10] sm:$0xff] %v2557
        %2990 = vst [vmem:[%s191 + $0x18] sm:$0xff] %v2559
        %2991 = vst [vmem:[%s191 + $0x20] sm:$0xff] %v2628
        %2992 = vst [vmem:[%s191 + $0x28] sm:$0xff] %v2630
        %2993 = vst [vmem:[%s191 + $0x30] sm:$0xff] %v2699
        %2994 = vst [vmem:[%s191 + $0x38] sm:$0xff] %v2701
        %2995 = vst [vmem:[%s191 + $0x40] sm:$0xff] %v2770
        %2996 = vst [vmem:[%s191 + $0x48] sm:$0xff] %v2772
        %2997 = vst [vmem:[%s191 + $0x50] sm:$0xff] %v2841
        %2998 = vst [vmem:[%s191 + $0x58] sm:$0xff] %v2843
        %2999 = vst [vmem:[%s191 + $0x60] sm:$0xff] %v2912
        %3000 = vst [vmem:[%s191 + $0x68] sm:$0xff] %v2914
        %3001 = vst [vmem:[%s191 + $0x70] sm:$0xff] %v2983
        %3002 = vst [vmem:[%s191 + $0x78] sm:$0xff] %v2985
        %s3003 = sand.u32 %s115, 1
        %s3004 = scalar_lea.sflag [#allocation3], %s3003
        %s3005 = sand.u32 %s115, 1
        %s3006 = smul.addr %s3005, 128
        %s3007 = scalar_lea.vmem [#allocation2], %s3006
        // Predicated region
        $region37: #{tpu_custom_call.1} parent=35 // pred_check
          %p3008 = pneg %p125
        $region38: #{tpu_custom_call.1} parent=35 // pred_check_branch
          %3010 = sbr.rel (%p3008) target = $region40
        $region39: #{tpu_custom_call.1} parent=35 // pred_region
          %s3011 = smul.u32 16, %s18
          %s3013 = ssub.s32 2048, 2048
          %3014 = vsyncadd %s3004, %s3013
          %s3015 = smul.addr %s3011, 128
          %s3016 = scalar_lea.hbm %s4, %s3015
          %s3018 = sshll.u32 %s3007, 4
          %s3019 = int_to_ptr.vmem [resolvable:$true] %s3018
          %3021 = dma.vmem_to_hbm [thread:$0]  %s3019, 2048, %s3016, %s3004
        $region40: #{tpu_custom_call.1} parent=35 // pred_fallthru
          _
      $region36: #{tpu_custom_call.1} parent=5 // pred_fallthru
        _
      %p3022 = scmp.le.s32.totalorder 2, %s13
      // Predicated region
      $region41: #{tpu_custom_call.1} parent=5 // pred_check
        %p3023 = pneg %p3022
      $region42: #{tpu_custom_call.1} parent=5 // pred_check_branch
        %3025 = sbr.rel (%p3023) target = $region44
      $region43: #{tpu_custom_call.1} parent=5 // pred_region
        %s3026 = ssub.s32 %s13, 2
        // Predicated region
        $region45: #{tpu_custom_call.1} parent=43 // pred_check
          %p3027 = pneg %p131
        $region46: #{tpu_custom_call.1} parent=43 // pred_check_branch
          %3029 = sbr.rel (%p3027) target = $region48
        $region47: #{tpu_custom_call.1} parent=43 // pred_region
          %s3030 = sand.u32 %s116, 1
          %s3031 = scalar_lea.sflag [#allocation3], %s3030
          %s3032 = sand.u32 %s116, 1
          %s3033 = smul.addr %s3032, 128
          %s3034 = scalar_lea.vmem [#allocation2], %s3033
          %3035 = dma.done %s3031, 2048
        $region48: #{tpu_custom_call.1} parent=43 // pred_fallthru
          _
      $region44: #{tpu_custom_call.1} parent=5 // pred_fallthru
        _
    $region6: #{tpu_custom_call.1} parent=1 // loop_footer
      %s17 = sadd.s32 1, %s13
    $region7: #{tpu_custom_call.1} parent=1 // loop_footer_branch
      %12 = sbr.rel target = $region3
    $region8: #{tpu_custom_call.1} parent=1 // loop_exit
      _
    %3036 = vsyncpa [#allocation3], 1
    %s3037 = scalar_lea.sflag [#allocation3], 1
    %3038 = vsyncpa %s3037, 1

</llo_original>
